<compile_context>
chip_gen: v5e
topology: v5e:2x2
jax: 0.10.0
libtpu: 0.0.40
codegen_flags: <defaults>
</compile_context>

<pallas_src>
import functools

import jax
import jax.numpy as jnp
from jax.experimental import pallas as pl
from jax.experimental.pallas import tpu as pltpu


def _round_up(x, m):
    return (x + m - 1) // m * m


def _mil_attn_surv_kernel(
        # inputs
        h_ref, w1_ref, b1_ref, wab_ref, bab_ref, wc_ref, bc_ref,
        wcls_ref, bcls_ref,
        # outputs
        haz_ref, surv_ref, yhat_ref, araw_ref,
        # scratch
        m_scr, l_scr, macc_scr,
        *, n_instances, tile_n, attn_dim):
    i = pl.program_id(0)

    # ---- init online-softmax state at the first instance tile --------------------
    @pl.when(i == 0)
    def _init():
        m_scr[...] = jnp.full_like(m_scr, -jnp.inf)
        l_scr[...] = jnp.zeros_like(l_scr)
        macc_scr[...] = jnp.zeros_like(macc_scr)

    # valid-row mask for the (possibly partial) last tile
    row = jax.lax.broadcasted_iota(jnp.int32, (tile_n, 1), 0) + i * tile_n
    valid = row < n_instances                                            # [T, 1]

    # ---- fc: Linear(L0, L1) + ReLU (bf16 MXU, f32 accumulation) ------------------
    h_t = h_ref[...]                                                     # [T, L0] bf16
    h1 = jnp.dot(h_t, w1_ref[...],
                 preferred_element_type=jnp.float32) + b1_ref[...]       # [T, L1] f32
    h1 = jnp.maximum(h1, 0.0)
    h1 = jnp.where(valid, h1, 0.0)                                       # kill padded rows

    # ---- Attn_Net_Gated: fused [L1, 2D] gate projection --------------------------
    g = jnp.dot(h1.astype(wab_ref.dtype), wab_ref[...],
                preferred_element_type=jnp.float32) + bab_ref[...]       # [T, 2D]
    a = jnp.tanh(g[:, :attn_dim])                                        # [T, D]
    b = jax.nn.sigmoid(g[:, attn_dim:])                                  # [T, D]
    ab = a * b                                                           # [T, D]

    # ---- attention score: VPU multiply + lane reduce (no 1-column MXU pass) ------
    s = jnp.sum(ab * wc_ref[...], axis=-1, keepdims=True) + bc_ref[...]  # [T, 1]
    araw_ref[...] = s                                                    # raw (pre-softmax)
    s = jnp.where(valid, s, -jnp.inf)

    # ---- online softmax + weighted feature accumulation --------------------------
    m_prev = m_scr[...]                                                  # (1, 1)
    m_new = jnp.maximum(m_prev, jnp.max(s, axis=0, keepdims=True))       # (1, 1)
    alpha = jnp.exp(m_prev - m_new)                                      # (1, 1)
    e = jnp.where(valid, jnp.exp(s - m_new), 0.0)                        # [T, 1]
    l_scr[...] = alpha * l_scr[...] + jnp.sum(e, axis=0, keepdims=True)
    macc_scr[...] = alpha * macc_scr[...] + jnp.sum(e * h1, axis=0, keepdims=True)
    m_scr[...] = m_new

    # ---- final step: classifier, hazards, S = cumprod(1 - hazards), Y_hat --------
    @pl.when(i == pl.num_programs(0) - 1)
    def _finalize():
        M = macc_scr[...] / l_scr[...]                                   # [1, L1]
        logits = jnp.dot(M, wcls_ref[...],
                         preferred_element_type=jnp.float32) + bcls_ref[...]  # [1, C]
        hazards = jax.nn.sigmoid(logits)
        haz_ref[...] = hazards

        C = logits.shape[1]
        col = jax.lax.broadcasted_iota(jnp.int32, logits.shape, 1)
        maxv = jnp.max(logits, axis=1, keepdims=True)
        cand = jnp.where(logits >= maxv, col, C)
        yhat_ref[...] = jnp.min(cand, axis=1, keepdims=True)             # first-occurrence argmax

        v = 1.0 - hazards
        running = jnp.ones((1, 1), jnp.float32)
        S = jnp.zeros_like(hazards)
        for j in range(C):  # C is small & static; unrolled cumprod over lanes
            vj = jnp.sum(jnp.where(col == j, v, 0.0), axis=1, keepdims=True)
            running = running * vj
            S = jnp.where(col == j, running, S)
        surv_ref[...] = S


def mil_attention_fc_surv_forward(params, h, *, tile_n=512):
    """Forward pass of MIL_Attention_fc_surv. Returns (hazards, S, Y_hat, A_raw, {})."""
    N, L0 = h.shape
    L1 = params["w1"].shape[1]
    D = params["wa"].shape[1]
    C = params["wcls"].shape[1]

    tile_n = _round_up(min(tile_n, N), 8)
    grid = (pl.cdiv(N, tile_n),)

    bf16, f32 = jnp.bfloat16, jnp.float32
    h_b = h.astype(bf16)
    w1 = params["w1"].astype(bf16)
    b1 = params["b1"].reshape(1, L1).astype(f32)
    wab = jnp.concatenate([params["wa"], params["wb"]], axis=1).astype(bf16)   # [L1, 2D]
    bab = jnp.concatenate([params["ba"].reshape(1, D),
                           params["bb"].reshape(1, D)], axis=1).astype(f32)    # [1, 2D]
    wc = params["wc"].reshape(1, D).astype(f32)                                # row form
    bc = params["bc"].reshape(1, 1).astype(f32)
    wcls = params["wcls"].astype(f32)
    bcls = params["bcls"].reshape(1, C).astype(f32)

    resident = lambda i: (0, 0)   # weights / accumulated outputs stay resident in VMEM

    kernel = functools.partial(_mil_attn_surv_kernel,
                               n_instances=N, tile_n=tile_n, attn_dim=D)

    flops = 2 * N * (L0 * L1 + L1 * 2 * D + D + L1) + 2 * L1 * C
    transcendentals = N * (2 * D + 1) + 2 * C
    bytes_accessed = (h_b.size * 2 + (w1.size + wab.size) * 2
                      + (b1.size + bab.size + wc.size + bc.size
                         + wcls.size + bcls.size) * 4
                      + (N + 2 * C + 1) * 4)

    hazards, S, yhat, a_col = pl.pallas_call(
        kernel,
        grid_spec=pltpu.PrefetchScalarGridSpec(
            num_scalar_prefetch=0,
            grid=grid,
            in_specs=[
                pl.BlockSpec((tile_n, L0), lambda i: (i, 0)),   # h tile (streamed)
                pl.BlockSpec((L0, L1), resident),               # w1
                pl.BlockSpec((1, L1), resident),                # b1
                pl.BlockSpec((L1, 2 * D), resident),            # wa|wb fused
                pl.BlockSpec((1, 2 * D), resident),             # ba|bb fused
                pl.BlockSpec((1, D), resident),                 # wc (row)
                pl.BlockSpec((1, 1), resident),                 # bc
                pl.BlockSpec((L1, C), resident),                # classifier W
                pl.BlockSpec((1, C), resident),                 # classifier b
            ],
            out_specs=(
                pl.BlockSpec((1, C), resident),                 # hazards
                pl.BlockSpec((1, C), resident),                 # S
                pl.BlockSpec((1, 1), resident),                 # Y_hat
                pl.BlockSpec((tile_n, 1), lambda i: (i, 0)),    # raw attention column
            ),
            scratch_shapes=[
                pltpu.VMEM((1, 1), jnp.float32),    # running max
                pltpu.VMEM((1, 1), jnp.float32),    # running softmax denominator
                pltpu.VMEM((1, L1), jnp.float32),   # running weighted feature sum
            ],
        ),
        out_shape=(
            jax.ShapeDtypeStruct((1, C), jnp.float32),   # hazards
            jax.ShapeDtypeStruct((1, C), jnp.float32),   # S
            jax.ShapeDtypeStruct((1, 1), jnp.int32),     # Y_hat
            jax.ShapeDtypeStruct((N, 1), jnp.float32),   # raw attention (column)
        ),
        compiler_params=pltpu.CompilerParams(
            dimension_semantics=("arbitrary",),          # sequential online reduction over N
            vmem_limit_bytes=64 * 1024 * 1024,
        ),
        cost_estimate=pl.CostEstimate(
            flops=flops, transcendentals=transcendentals, bytes_accessed=bytes_accessed),
    )(h_b, w1, b1, wab, bab, wc, bc, wcls, bcls)

    A_raw = jnp.transpose(a_col, (1, 0))   # [1, N], matches torch.transpose(A, 1, 0)
    return hazards, S, yhat, A_raw, {}


def _init_params(key, L0, L1, D, n_classes):
    """Deterministic synthetic parameters (shapes follow the PyTorch module)."""
    ks = jax.random.split(key, 10)

    def lin(kw, kb, fan_in, fan_out):
        scale = 1.0 / jnp.sqrt(jnp.float32(fan_in))
        w = jax.random.normal(kw, (fan_in, fan_out), jnp.float32) * scale
        b = jax.random.normal(kb, (1, fan_out), jnp.float32) * scale
        return w, b

    w1, b1 = lin(ks[0], ks[1], L0, L1)            # fc: Linear(L0, L1) + ReLU
    wa, ba = lin(ks[2], ks[3], L1, D)             # attention_a: Linear(L1, D) -> tanh
    wb, bb = lin(ks[4], ks[5], L1, D)             # attention_b: Linear(L1, D) -> sigmoid
    wc, bc = lin(ks[6], ks[7], D, 1)              # attention_c: Linear(D, 1)
    wcls, bcls = lin(ks[8], ks[9], L1, n_classes)  # classifier: Linear(L1, C)
    return {"w1": w1, "b1": b1, "wa": wa, "ba": ba, "wb": wb, "bb": bb,
            "wc": wc, "bc": bc, "wcls": wcls, "bcls": bcls}


def _reference_forward(params, h):
    """Pure-JAX reference mirroring the PyTorch forward (same bf16 matmul inputs)."""
    bf16, f32 = jnp.bfloat16, jnp.float32
    h1 = jnp.dot(h.astype(bf16), params["w1"].astype(bf16),
                 preferred_element_type=f32) + params["b1"]
    h1 = jnp.maximum(h1, 0.0)
    h1b = h1.astype(bf16)
    a = jnp.tanh(jnp.dot(h1b, params["wa"].astype(bf16),
                         preferred_element_type=f32) + params["ba"])
    b = jax.nn.sigmoid(jnp.dot(h1b, params["wb"].astype(bf16),
                               preferred_element_type=f32) + params["bb"])
    A = (a * b) @ params["wc"] + params["bc"]           # [N, 1]
    A = A.T                                             # [1, N]
    A_raw = A
    A = jax.nn.softmax(A, axis=1)
    M = A @ h1                                          # [1, L1]
    logits = M @ params["wcls"] + params["bcls"]        # [1, C]
    yhat = jnp.argmax(logits, axis=1, keepdims=True).astype(jnp.int32)
    hazards = jax.nn.sigmoid(logits)
    S = jnp.cumprod(1.0 - hazards, axis=1)
    return hazards, S, yhat, A_raw


def _check(outs, refs, N, C):
    hazards, S, yhat, A_raw = outs
    r_haz, r_S, r_yhat, r_Araw = refs
    assert hazards.shape == (1, C) and S.shape == (1, C)
    assert yhat.shape == (1, 1) and A_raw.shape == (1, N)
    assert jnp.allclose(A_raw, r_Araw, atol=2e-2, rtol=2e-2)
    assert jnp.allclose(hazards, r_haz, atol=2e-2, rtol=2e-2)
    assert jnp.allclose(S, r_S, atol=2e-2, rtol=2e-2)
    assert int(yhat[0, 0]) == int(r_yhat[0, 0])


if __name__ == "__main__":
    # Scaled-down "small" config [1024, 512, 256] -> [256, 256, 128], n_classes=4.
    # N=300 gives a 3-step grid with a partial last tile (exercises masking).
    N, L0, L1, D, C = 300, 256, 256, 128, 4

    key = jax.random.PRNGKey(0)
    k_param, k_x = jax.random.split(key)
    params = _init_params(k_param, L0, L1, D, C)
    x_path = jax.random.normal(k_x, (N, L0), jnp.float32)

    refs = _reference_forward(params, x_path)

    # Multi-step grid with a partial last tile (online-softmax accumulation path).
    fwd_small_tile = jax.jit(functools.partial(mil_attention_fc_surv_forward,
                                               params, tile_n=128))
    hazards, S, yhat, A_raw, _ = fwd_small_tile(x_path)
    jax.block_until_ready((hazards, S, yhat, A_raw))
    _check((hazards, S, yhat, A_raw), refs, N, C)

    # Default large tile: single grid step where init + finalize fire together.
    fwd_default = jax.jit(functools.partial(mil_attention_fc_surv_forward, params))
    hazards, S, yhat, A_raw, _ = fwd_default(x_path)
    jax.block_until_ready((hazards, S, yhat, A_raw))
    _check((hazards, S, yhat, A_raw), refs, N, C)

    print("KERNEL_OK")
</pallas_src>

<mosaic_0001>
module attributes {stable_mosaic.version = 11 : i64} {
  func.func @_mil_attn_surv_kernel(%arg0: i32, %arg1: memref<128x256xbf16, #tpu.memory_space<vmem>>, %arg2: memref<256x256xbf16, #tpu.memory_space<vmem>>, %arg3: memref<1x256xf32, #tpu.memory_space<vmem>>, %arg4: memref<256x256xbf16, #tpu.memory_space<vmem>>, %arg5: memref<1x256xf32, #tpu.memory_space<vmem>>, %arg6: memref<1x128xf32, #tpu.memory_space<vmem>>, %arg7: memref<1x1xf32, #tpu.memory_space<vmem>>, %arg8: memref<256x4xf32, #tpu.memory_space<vmem>>, %arg9: memref<1x4xf32, #tpu.memory_space<vmem>>, %arg10: memref<1x4xf32, #tpu.memory_space<vmem>>, %arg11: memref<1x4xf32, #tpu.memory_space<vmem>>, %arg12: memref<1x1xi32, #tpu.memory_space<vmem>>, %arg13: memref<128x1xf32, #tpu.memory_space<vmem>>, %arg14: memref<1x1xf32, #tpu.memory_space<vmem>>, %arg15: memref<1x1xf32, #tpu.memory_space<vmem>>, %arg16: memref<1x256xf32, #tpu.memory_space<vmem>>) attributes {dimension_semantics = [#tpu.dimension_semantics<arbitrary>], iteration_bounds = array<i64: 3>, scalar_prefetch = 0 : i64, scratch_operands = 3 : i64, tpu.core_type = #tpu.core_type<tc>, window_params = [{transform_indices = @transform_0, window_bounds = array<i64: 128, 256>}, {pipeline_mode = #tpu.pipeline_mode<synchronous>, transform_indices = @transform_1, window_bounds = array<i64: 256, 256>}, {pipeline_mode = #tpu.pipeline_mode<synchronous>, transform_indices = @transform_2, window_bounds = array<i64: 1, 256>}, {pipeline_mode = #tpu.pipeline_mode<synchronous>, transform_indices = @transform_3, window_bounds = array<i64: 256, 256>}, {pipeline_mode = #tpu.pipeline_mode<synchronous>, transform_indices = @transform_4, window_bounds = array<i64: 1, 256>}, {pipeline_mode = #tpu.pipeline_mode<synchronous>, transform_indices = @transform_5, window_bounds = array<i64: 1, 128>}, {pipeline_mode = #tpu.pipeline_mode<synchronous>, transform_indices = @transform_6, window_bounds = array<i64: 1, 1>}, {pipeline_mode = #tpu.pipeline_mode<synchronous>, transform_indices = @transform_7, window_bounds = array<i64: 256, 4>}, {pipeline_mode = #tpu.pipeline_mode<synchronous>, transform_indices = @transform_8, window_bounds = array<i64: 1, 4>}, {pipeline_mode = #tpu.pipeline_mode<synchronous>, transform_indices = @transform_9, window_bounds = array<i64: 1, 4>}, {pipeline_mode = #tpu.pipeline_mode<synchronous>, transform_indices = @transform_10, window_bounds = array<i64: 1, 4>}, {pipeline_mode = #tpu.pipeline_mode<synchronous>, transform_indices = @transform_11, window_bounds = array<i64: 1, 1>}, {transform_indices = @transform_12, window_bounds = array<i64: 128, 1>}]} {
    %c0_i32 = arith.constant 0 : i32
    %0 = arith.cmpi eq, %arg0, %c0_i32 : i32
    %1 = arith.extui %0 : i1 to i32
    %c0_i32_0 = arith.constant 0 : i32
    %2 = arith.cmpi ne, %1, %c0_i32_0 : i32
    scf.if %2 {
      %cst_39 = arith.constant 0xFF800000 : f32
      %77 = vector.broadcast %cst_39 : f32 to vector<1x1xf32>
      %c0_40 = arith.constant 0 : index
      %c0_41 = arith.constant 0 : index
      %78 = vector.load %arg14[%c0_40, %c0_41] : memref<1x1xf32, #tpu.memory_space<vmem>>, vector<1x1xf32>
      tpu.vector_store %arg14[%c0_40, %c0_41], %77 {strides = array<i32>} : memref<1x1xf32, #tpu.memory_space<vmem>>, vector<1x1xf32>,
      %cst_42 = arith.constant 0.000000e+00 : f32
      %79 = vector.broadcast %cst_42 : f32 to vector<1x1xf32>
      %c0_43 = arith.constant 0 : index
      %c0_44 = arith.constant 0 : index
      %80 = vector.load %arg15[%c0_43, %c0_44] : memref<1x1xf32, #tpu.memory_space<vmem>>, vector<1x1xf32>
      tpu.vector_store %arg15[%c0_43, %c0_44], %79 {strides = array<i32>} : memref<1x1xf32, #tpu.memory_space<vmem>>, vector<1x1xf32>,
      %cst_45 = arith.constant 0.000000e+00 : f32
      %81 = vector.broadcast %cst_45 : f32 to vector<1x256xf32>
      %c0_46 = arith.constant 0 : index
      %c0_47 = arith.constant 0 : index
      %82 = vector.load %arg16[%c0_46, %c0_47] : memref<1x256xf32, #tpu.memory_space<vmem>>, vector<1x256xf32>
      tpu.vector_store %arg16[%c0_46, %c0_47], %81 {strides = array<i32>} : memref<1x256xf32, #tpu.memory_space<vmem>>, vector<1x256xf32>,
    } else {
    }
    %3 = tpu.iota {dimensions = array<i32: 0>} : vector<128x1xi32>
    %c128_i32 = arith.constant 128 : i32
    %4 = arith.muli %arg0, %c128_i32 : i32
    %5 = vector.broadcast %4 : i32 to vector<128x1xi32>
    %6 = arith.addi %3, %5 : vector<128x1xi32>
    %c300_i32 = arith.constant 300 : i32
    %7 = vector.broadcast %c300_i32 : i32 to vector<128x1xi32>
    %8 = arith.cmpi slt, %6, %7 : vector<128x1xi32>
    %c0 = arith.constant 0 : index
    %c0_1 = arith.constant 0 : index
    %9 = vector.load %arg1[%c0, %c0_1] : memref<128x256xbf16, #tpu.memory_space<vmem>>, vector<128x256xbf16>
    %c0_2 = arith.constant 0 : index
    %c0_3 = arith.constant 0 : index
    %10 = vector.load %arg2[%c0_2, %c0_3] : memref<256x256xbf16, #tpu.memory_space<vmem>>, vector<256x256xbf16>
    %cst = arith.constant dense<0.000000e+00> : vector<128x256xf32>
    %11 = tpu.matmul %9, %10, %cst {dimension_numbers = #tpu.dot_dimension_numbers<[1], [0], [0], [1], [0, 0, 1, 1], [], []>} : vector<128x256xbf16>, vector<256x256xbf16>, vector<128x256xf32> -> vector<128x256xf32>
    %c0_4 = arith.constant 0 : index
    %c0_5 = arith.constant 0 : index
    %12 = vector.load %arg3[%c0_4, %c0_5] : memref<1x256xf32, #tpu.memory_space<vmem>>, vector<1x256xf32>
    %13 = vector.broadcast %12 : vector<1x256xf32> to vector<128x256xf32>
    %14 = arith.addf %11, %13 : vector<128x256xf32>
    %cst_6 = arith.constant 0.000000e+00 : f32
    %15 = vector.broadcast %cst_6 : f32 to vector<128x256xf32>
    %16 = arith.maximumf %14, %15 : vector<128x256xf32>
    %cst_7 = arith.constant 0.000000e+00 : f32
    %17 = vector.shape_cast %8 : vector<128x1xi1> to vector<128x1xi1>
    %18 = vector.broadcast %17 : vector<128x1xi1> to vector<128x256xi1>
    %19 = vector.broadcast %cst_7 : f32 to vector<128x256xf32>
    %20 = arith.select %18, %16, %19 : vector<128x256xi1>, vector<128x256xf32>
    %21 = arith.truncf %20 : vector<128x256xf32> to vector<128x256xbf16>
    %c0_8 = arith.constant 0 : index
    %c0_9 = arith.constant 0 : index
    %22 = vector.load %arg4[%c0_8, %c0_9] : memref<256x256xbf16, #tpu.memory_space<vmem>>, vector<256x256xbf16>
    %cst_10 = arith.constant dense<0.000000e+00> : vector<128x256xf32>
    %23 = tpu.matmul %21, %22, %cst_10 {dimension_numbers = #tpu.dot_dimension_numbers<[1], [0], [0], [1], [0, 0, 1, 1], [], []>} : vector<128x256xbf16>, vector<256x256xbf16>, vector<128x256xf32> -> vector<128x256xf32>
    %c0_11 = arith.constant 0 : index
    %c0_12 = arith.constant 0 : index
    %24 = vector.load %arg5[%c0_11, %c0_12] : memref<1x256xf32, #tpu.memory_space<vmem>>, vector<1x256xf32>
    %25 = vector.broadcast %24 : vector<1x256xf32> to vector<128x256xf32>
    %26 = arith.addf %23, %25 : vector<128x256xf32>
    %27 = vector.extract_strided_slice %26 {offsets = [0, 0], sizes = [128, 128], strides = [1, 1]} : vector<128x256xf32> to vector<128x128xf32>
    %28 = math.tanh %27 : vector<128x128xf32>
    %29 = vector.extract_strided_slice %26 {offsets = [0, 128], sizes = [128, 128], strides = [1, 1]} : vector<128x256xf32> to vector<128x128xf32>
    %30 = arith.negf %29 : vector<128x128xf32>
    %31 = math.exp %30 : vector<128x128xf32>
    %cst_13 = arith.constant 1.000000e+00 : f32
    %32 = vector.broadcast %cst_13 : f32 to vector<128x128xf32>
    %33 = arith.addf %32, %31 : vector<128x128xf32>
    %34 = arith.divf %32, %33 : vector<128x128xf32>
    %35 = arith.mulf %28, %34 : vector<128x128xf32>
    %c0_14 = arith.constant 0 : index
    %c0_15 = arith.constant 0 : index
    %36 = vector.load %arg6[%c0_14, %c0_15] : memref<1x128xf32, #tpu.memory_space<vmem>>, vector<1x128xf32>
    %37 = vector.broadcast %36 : vector<1x128xf32> to vector<128x128xf32>
    %38 = arith.mulf %35, %37 : vector<128x128xf32>
    %cst_16 = arith.constant dense<0.000000e+00> : vector<128xf32>
    %39 = vector.multi_reduction <add>, %38, %cst_16 [1] : vector<128x128xf32> to vector<128xf32>
    %40 = vector.shape_cast %39 : vector<128xf32> to vector<128x1xf32>
    %c0_17 = arith.constant 0 : index
    %c0_18 = arith.constant 0 : index
    %41 = vector.load %arg7[%c0_17, %c0_18] : memref<1x1xf32, #tpu.memory_space<vmem>>, vector<1x1xf32>
    %42 = vector.broadcast %41 : vector<1x1xf32> to vector<128x1xf32>
    %43 = arith.addf %40, %42 : vector<128x1xf32>
    %c0_19 = arith.constant 0 : index
    %c0_20 = arith.constant 0 : index
    %44 = vector.load %arg13[%c0_19, %c0_20] : memref<128x1xf32, #tpu.memory_space<vmem>>, vector<128x1xf32>
    tpu.vector_store %arg13[%c0_19, %c0_20], %43 {strides = array<i32>} : memref<128x1xf32, #tpu.memory_space<vmem>>, vector<128x1xf32>,
    %cst_21 = arith.constant 0xFF800000 : f32
    %45 = vector.broadcast %cst_21 : f32 to vector<128x1xf32>
    %46 = arith.select %8, %43, %45 : vector<128x1xi1>, vector<128x1xf32>
    %c0_22 = arith.constant 0 : index
    %c0_23 = arith.constant 0 : index
    %47 = vector.load %arg14[%c0_22, %c0_23] : memref<1x1xf32, #tpu.memory_space<vmem>>, vector<1x1xf32>
    %cst_24 = arith.constant dense<0xFF800000> : vector<1xf32>
    %48 = vector.multi_reduction <maximumf>, %46, %cst_24 [0] : vector<128x1xf32> to vector<1xf32>
    %49 = vector.shape_cast %48 : vector<1xf32> to vector<1x1xf32>
    %50 = arith.maximumf %47, %49 : vector<1x1xf32>
    %51 = arith.subf %47, %50 : vector<1x1xf32>
    %52 = math.exp %51 : vector<1x1xf32>
    %53 = vector.broadcast %50 : vector<1x1xf32> to vector<128x1xf32>
    %54 = arith.subf %46, %53 : vector<128x1xf32>
    %55 = math.exp %54 : vector<128x1xf32>
    %cst_25 = arith.constant 0.000000e+00 : f32
    %56 = vector.broadcast %cst_25 : f32 to vector<128x1xf32>
    %57 = arith.select %8, %55, %56 : vector<128x1xi1>, vector<128x1xf32>
    %c0_26 = arith.constant 0 : index
    %c0_27 = arith.constant 0 : index
    %58 = vector.load %arg15[%c0_26, %c0_27] : memref<1x1xf32, #tpu.memory_space<vmem>>, vector<1x1xf32>
    %59 = arith.mulf %52, %58 : vector<1x1xf32>
    %cst_28 = arith.constant dense<0.000000e+00> : vector<1xf32>
    %60 = vector.multi_reduction <add>, %57, %cst_28 [0] : vector<128x1xf32> to vector<1xf32>
    %61 = vector.shape_cast %60 : vector<1xf32> to vector<1x1xf32>
    %62 = arith.addf %59, %61 : vector<1x1xf32>
    %c0_29 = arith.constant 0 : index
    %c0_30 = arith.constant 0 : index
    %63 = vector.load %arg15[%c0_29, %c0_30] : memref<1x1xf32, #tpu.memory_space<vmem>>, vector<1x1xf32>
    tpu.vector_store %arg15[%c0_29, %c0_30], %62 {strides = array<i32>} : memref<1x1xf32, #tpu.memory_space<vmem>>, vector<1x1xf32>,
    %c0_31 = arith.constant 0 : index
    %c0_32 = arith.constant 0 : index
    %64 = vector.load %arg16[%c0_31, %c0_32] : memref<1x256xf32, #tpu.memory_space<vmem>>, vector<1x256xf32>
    %65 = vector.broadcast %52 : vector<1x1xf32> to vector<1x256xf32>
    %66 = arith.mulf %65, %64 : vector<1x256xf32>
    %67 = vector.broadcast %57 : vector<128x1xf32> to vector<128x256xf32>
    %68 = arith.mulf %67, %20 : vector<128x256xf32>
    %cst_33 = arith.constant dense<0.000000e+00> : vector<256xf32>
    %69 = vector.multi_reduction <add>, %68, %cst_33 [0] : vector<128x256xf32> to vector<256xf32>
    %70 = vector.shape_cast %69 : vector<256xf32> to vector<1x256xf32>
    %71 = arith.addf %66, %70 : vector<1x256xf32>
    %c0_34 = arith.constant 0 : index
    %c0_35 = arith.constant 0 : index
    %72 = vector.load %arg16[%c0_34, %c0_35] : memref<1x256xf32, #tpu.memory_space<vmem>>, vector<1x256xf32>
    tpu.vector_store %arg16[%c0_34, %c0_35], %71 {strides = array<i32>} : memref<1x256xf32, #tpu.memory_space<vmem>>, vector<1x256xf32>,
    %c0_36 = arith.constant 0 : index
    %c0_37 = arith.constant 0 : index
    %73 = vector.load %arg14[%c0_36, %c0_37] : memref<1x1xf32, #tpu.memory_space<vmem>>, vector<1x1xf32>
    tpu.vector_store %arg14[%c0_36, %c0_37], %50 {strides = array<i32>} : memref<1x1xf32, #tpu.memory_space<vmem>>, vector<1x1xf32>,
    %c2_i32 = arith.constant 2 : i32
    %74 = arith.cmpi eq, %arg0, %c2_i32 : i32
    %75 = arith.extui %74 : i1 to i32
    %c0_i32_38 = arith.constant 0 : i32
    %76 = arith.cmpi ne, %75, %c0_i32_38 : i32
    scf.if %76 {
      %c0_39 = arith.constant 0 : index
      %c0_40 = arith.constant 0 : index
      %77 = vector.load %arg16[%c0_39, %c0_40] : memref<1x256xf32, #tpu.memory_space<vmem>>, vector<1x256xf32>
      %c0_41 = arith.constant 0 : index
      %c0_42 = arith.constant 0 : index
      %78 = vector.load %arg15[%c0_41, %c0_42] : memref<1x1xf32, #tpu.memory_space<vmem>>, vector<1x1xf32>
      %79 = vector.broadcast %78 : vector<1x1xf32> to vector<1x256xf32>
      %80 = arith.divf %77, %79 : vector<1x256xf32>
      %c0_43 = arith.constant 0 : index
      %c0_44 = arith.constant 0 : index
      %81 = vector.load %arg8[%c0_43, %c0_44] : memref<256x4xf32, #tpu.memory_space<vmem>>, vector<256x4xf32>
      %cst_45 = arith.constant dense<0.000000e+00> : vector<1x4xf32>
      %82 = tpu.matmul %80, %81, %cst_45 {dimension_numbers = #tpu.dot_dimension_numbers<[1], [0], [0], [1], [0, 0, 1, 1], [], []>} : vector<1x256xf32>, vector<256x4xf32>, vector<1x4xf32> -> vector<1x4xf32>
      %c0_46 = arith.constant 0 : index
      %c0_47 = arith.constant 0 : index
      %83 = vector.load %arg9[%c0_46, %c0_47] : memref<1x4xf32, #tpu.memory_space<vmem>>, vector<1x4xf32>
      %84 = arith.addf %82, %83 : vector<1x4xf32>
      %85 = arith.negf %84 : vector<1x4xf32>
      %86 = math.exp %85 : vector<1x4xf32>
      %cst_48 = arith.constant 1.000000e+00 : f32
      %87 = vector.broadcast %cst_48 : f32 to vector<1x4xf32>
      %88 = arith.addf %87, %86 : vector<1x4xf32>
      %89 = arith.divf %87, %88 : vector<1x4xf32>
      %c0_49 = arith.constant 0 : index
      %c0_50 = arith.constant 0 : index
      %90 = vector.load %arg10[%c0_49, %c0_50] : memref<1x4xf32, #tpu.memory_space<vmem>>, vector<1x4xf32>
      tpu.vector_store %arg10[%c0_49, %c0_50], %89 {strides = array<i32>} : memref<1x4xf32, #tpu.memory_space<vmem>>, vector<1x4xf32>,
      %91 = tpu.iota {dimensions = array<i32: 1>} : vector<1x4xi32>
      %cst_51 = arith.constant dense<0xFF800000> : vector<1xf32>
      %92 = vector.multi_reduction <maximumf>, %84, %cst_51 [1] : vector<1x4xf32> to vector<1xf32>
      %93 = vector.shape_cast %92 : vector<1xf32> to vector<1x1xf32>
      %94 = vector.broadcast %93 : vector<1x1xf32> to vector<1x4xf32>
      %95 = arith.cmpf oge, %84, %94 : vector<1x4xf32>
      %c4_i32 = arith.constant 4 : i32
      %96 = vector.broadcast %c4_i32 : i32 to vector<1x4xi32>
      %97 = arith.select %95, %91, %96 : vector<1x4xi1>, vector<1x4xi32>
      %cst_52 = arith.constant dense<2147483647> : vector<1xi32>
      %98 = vector.multi_reduction <minsi>, %97, %cst_52 [1] : vector<1x4xi32> to vector<1xi32>
      %99 = vector.shape_cast %98 : vector<1xi32> to vector<1x1xi32>
      %c0_53 = arith.constant 0 : index
      %c0_54 = arith.constant 0 : index
      %100 = vector.load %arg12[%c0_53, %c0_54] : memref<1x1xi32, #tpu.memory_space<vmem>>, vector<1x1xi32>
      tpu.vector_store %arg12[%c0_53, %c0_54], %99 {strides = array<i32>} : memref<1x1xi32, #tpu.memory_space<vmem>>, vector<1x1xi32>,
      %cst_55 = arith.constant 1.000000e+00 : f32
      %101 = vector.broadcast %cst_55 : f32 to vector<1x4xf32>
      %102 = arith.subf %101, %89 : vector<1x4xf32>
      %cst_56 = arith.constant 1.000000e+00 : f32
      %103 = vector.broadcast %cst_56 : f32 to vector<1x1xf32>
      %cst_57 = arith.constant 0.000000e+00 : f32
      %104 = vector.broadcast %cst_57 : f32 to vector<1x4xf32>
      %c0_i32_58 = arith.constant 0 : i32
      %105 = vector.broadcast %c0_i32_58 : i32 to vector<1x4xi32>
      %106 = arith.cmpi eq, %91, %105 : vector<1x4xi32>
      %cst_59 = arith.constant 0.000000e+00 : f32
      %107 = vector.broadcast %cst_59 : f32 to vector<1x4xf32>
      %108 = arith.select %106, %102, %107 : vector<1x4xi1>, vector<1x4xf32>
      %cst_60 = arith.constant dense<0.000000e+00> : vector<1xf32>
      %109 = vector.multi_reduction <add>, %108, %cst_60 [1] : vector<1x4xf32> to vector<1xf32>
      %110 = vector.shape_cast %109 : vector<1xf32> to vector<1x1xf32>
      %111 = arith.mulf %103, %110 : vector<1x1xf32>
      %c0_i32_61 = arith.constant 0 : i32
      %112 = vector.broadcast %c0_i32_61 : i32 to vector<1x4xi32>
      %113 = arith.cmpi eq, %91, %112 : vector<1x4xi32>
      %114 = vector.shape_cast %111 : vector<1x1xf32> to vector<1x1xf32>
      %115 = vector.broadcast %114 : vector<1x1xf32> to vector<1x4xf32>
      %116 = arith.select %113, %115, %104 : vector<1x4xi1>, vector<1x4xf32>
      %c1_i32 = arith.constant 1 : i32
      %117 = vector.broadcast %c1_i32 : i32 to vector<1x4xi32>
      %118 = arith.cmpi eq, %91, %117 : vector<1x4xi32>
      %cst_62 = arith.constant 0.000000e+00 : f32
      %119 = vector.broadcast %cst_62 : f32 to vector<1x4xf32>
      %120 = arith.select %118, %102, %119 : vector<1x4xi1>, vector<1x4xf32>
      %cst_63 = arith.constant dense<0.000000e+00> : vector<1xf32>
      %121 = vector.multi_reduction <add>, %120, %cst_63 [1] : vector<1x4xf32> to vector<1xf32>
      %122 = vector.shape_cast %121 : vector<1xf32> to vector<1x1xf32>
      %123 = arith.mulf %111, %122 : vector<1x1xf32>
      %c1_i32_64 = arith.constant 1 : i32
      %124 = vector.broadcast %c1_i32_64 : i32 to vector<1x4xi32>
      %125 = arith.cmpi eq, %91, %124 : vector<1x4xi32>
      %126 = vector.shape_cast %123 : vector<1x1xf32> to vector<1x1xf32>
      %127 = vector.broadcast %126 : vector<1x1xf32> to vector<1x4xf32>
      %128 = arith.select %125, %127, %116 : vector<1x4xi1>, vector<1x4xf32>
      %c2_i32_65 = arith.constant 2 : i32
      %129 = vector.broadcast %c2_i32_65 : i32 to vector<1x4xi32>
      %130 = arith.cmpi eq, %91, %129 : vector<1x4xi32>
      %cst_66 = arith.constant 0.000000e+00 : f32
      %131 = vector.broadcast %cst_66 : f32 to vector<1x4xf32>
      %132 = arith.select %130, %102, %131 : vector<1x4xi1>, vector<1x4xf32>
      %cst_67 = arith.constant dense<0.000000e+00> : vector<1xf32>
      %133 = vector.multi_reduction <add>, %132, %cst_67 [1] : vector<1x4xf32> to vector<1xf32>
      %134 = vector.shape_cast %133 : vector<1xf32> to vector<1x1xf32>
      %135 = arith.mulf %123, %134 : vector<1x1xf32>
      %c2_i32_68 = arith.constant 2 : i32
      %136 = vector.broadcast %c2_i32_68 : i32 to vector<1x4xi32>
      %137 = arith.cmpi eq, %91, %136 : vector<1x4xi32>
      %138 = vector.shape_cast %135 : vector<1x1xf32> to vector<1x1xf32>
      %139 = vector.broadcast %138 : vector<1x1xf32> to vector<1x4xf32>
      %140 = arith.select %137, %139, %128 : vector<1x4xi1>, vector<1x4xf32>
      %c3_i32 = arith.constant 3 : i32
      %141 = vector.broadcast %c3_i32 : i32 to vector<1x4xi32>
      %142 = arith.cmpi eq, %91, %141 : vector<1x4xi32>
      %cst_69 = arith.constant 0.000000e+00 : f32
      %143 = vector.broadcast %cst_69 : f32 to vector<1x4xf32>
      %144 = arith.select %142, %102, %143 : vector<1x4xi1>, vector<1x4xf32>
      %cst_70 = arith.constant dense<0.000000e+00> : vector<1xf32>
      %145 = vector.multi_reduction <add>, %144, %cst_70 [1] : vector<1x4xf32> to vector<1xf32>
      %146 = vector.shape_cast %145 : vector<1xf32> to vector<1x1xf32>
      %147 = arith.mulf %135, %146 : vector<1x1xf32>
      %c3_i32_71 = arith.constant 3 : i32
      %148 = vector.broadcast %c3_i32_71 : i32 to vector<1x4xi32>
      %149 = arith.cmpi eq, %91, %148 : vector<1x4xi32>
      %150 = vector.shape_cast %147 : vector<1x1xf32> to vector<1x1xf32>
      %151 = vector.broadcast %150 : vector<1x1xf32> to vector<1x4xf32>
      %152 = arith.select %149, %151, %140 : vector<1x4xi1>, vector<1x4xf32>
      %c0_72 = arith.constant 0 : index
      %c0_73 = arith.constant 0 : index
      %153 = vector.load %arg11[%c0_72, %c0_73] : memref<1x4xf32, #tpu.memory_space<vmem>>, vector<1x4xf32>
      tpu.vector_store %arg11[%c0_72, %c0_73], %152 {strides = array<i32>} : memref<1x4xf32, #tpu.memory_space<vmem>>, vector<1x4xf32>,
    } else {
    }
    return
  }
  func.func @transform_0(%arg0: i32) -> (i32, i32) {
    %c0_i32 = arith.constant 0 : i32
    %c0_i32_0 = arith.constant 0 : i32
    return %arg0, %c0_i32 : i32, i32
  }
  func.func @transform_1(%arg0: i32) -> (i32, i32) {
    %c0_i32 = arith.constant 0 : i32
    %c0_i32_0 = arith.constant 0 : i32
    %c0_i32_1 = arith.constant 0 : i32
    return %c0_i32, %c0_i32_0 : i32, i32
  }
  func.func @transform_2(%arg0: i32) -> (i32, i32) {
    %c0_i32 = arith.constant 0 : i32
    %c0_i32_0 = arith.constant 0 : i32
    %c0_i32_1 = arith.constant 0 : i32
    return %c0_i32, %c0_i32_0 : i32, i32
  }
  func.func @transform_3(%arg0: i32) -> (i32, i32) {
    %c0_i32 = arith.constant 0 : i32
    %c0_i32_0 = arith.constant 0 : i32
    %c0_i32_1 = arith.constant 0 : i32
    return %c0_i32, %c0_i32_0 : i32, i32
  }
  func.func @transform_4(%arg0: i32) -> (i32, i32) {
    %c0_i32 = arith.constant 0 : i32
    %c0_i32_0 = arith.constant 0 : i32
    %c0_i32_1 = arith.constant 0 : i32
    return %c0_i32, %c0_i32_0 : i32, i32
  }
  func.func @transform_5(%arg0: i32) -> (i32, i32) {
    %c0_i32 = arith.constant 0 : i32
    %c0_i32_0 = arith.constant 0 : i32
    %c0_i32_1 = arith.constant 0 : i32
    return %c0_i32, %c0_i32_0 : i32, i32
  }
  func.func @transform_6(%arg0: i32) -> (i32, i32) {
    %c0_i32 = arith.constant 0 : i32
    %c0_i32_0 = arith.constant 0 : i32
    %c0_i32_1 = arith.constant 0 : i32
    return %c0_i32, %c0_i32_0 : i32, i32
  }
  func.func @transform_7(%arg0: i32) -> (i32, i32) {
    %c0_i32 = arith.constant 0 : i32
    %c0_i32_0 = arith.constant 0 : i32
    %c0_i32_1 = arith.constant 0 : i32
    return %c0_i32, %c0_i32_0 : i32, i32
  }
  func.func @transform_8(%arg0: i32) -> (i32, i32) {
    %c0_i32 = arith.constant 0 : i32
    %c0_i32_0 = arith.constant 0 : i32
    %c0_i32_1 = arith.constant 0 : i32
    return %c0_i32, %c0_i32_0 : i32, i32
  }
  func.func @transform_9(%arg0: i32) -> (i32, i32) {
    %c0_i32 = arith.constant 0 : i32
    %c0_i32_0 = arith.constant 0 : i32
    %c0_i32_1 = arith.constant 0 : i32
    return %c0_i32, %c0_i32_0 : i32, i32
  }
  func.func @transform_10(%arg0: i32) -> (i32, i32) {
    %c0_i32 = arith.constant 0 : i32
    %c0_i32_0 = arith.constant 0 : i32
    %c0_i32_1 = arith.constant 0 : i32
    return %c0_i32, %c0_i32_0 : i32, i32
  }
  func.func @transform_11(%arg0: i32) -> (i32, i32) {
    %c0_i32 = arith.constant 0 : i32
    %c0_i32_0 = arith.constant 0 : i32
    %c0_i32_1 = arith.constant 0 : i32
    return %c0_i32, %c0_i32_0 : i32, i32
  }
  func.func @transform_12(%arg0: i32) -> (i32, i32) {
    %c0_i32 = arith.constant 0 : i32
    %c0_i32_0 = arith.constant 0 : i32
    return %arg0, %c0_i32 : i32, i32
  }
}

</mosaic_0001>

<llo_original>
// kernel: mil_attention_fc_surv_forward.1
$region0: #{mil_attention_fc_surv_forward.1}
  #allocation0 [shape = 'u32[]', space=smem, size = 0x4, offset = 0x4, fixed_abs, tag = 'smem constant byte address 0x4 - core index']
  #allocation1 [shape = 'u32[72,128]{1,0:T(1,128)}', space=vmem, size = 0x9000, scoped, tag = 'internal scratch']
  #allocation2 [shape = 'f32[1,1]{1,0:T(1,128)}', space=vmem, size = 0x200, scoped, tag = 'scratch operand']
  #allocation3 [shape = 'f32[1,1]{1,0:T(1,128)}', space=vmem, size = 0x200, scoped, tag = 'scratch operand']
  #allocation4 [shape = 'f32[1,256]{1,0:T(1,128)}', space=vmem, size = 0x400, scoped, tag = 'scratch operand']
  #allocation5 [shape = 'f32[1,1]{1,0:T(1,128)S(1)}', space=vmem, size = 0x200, scoped, tag = 'scoped memory for mil_attention_fc_surv_forward.1']
  %s0 = inlined_call_operand.vmem [shape: bf16[300,256], index: 0, kind: input, shape index: {}]
  %s1 = inlined_call_operand.vmem [shape: bf16[256,256], index: 1, kind: input, shape index: {}]
  %s2 = inlined_call_operand.vmem [shape: f32[1,256], index: 2, kind: input, shape index: {}]
  %s3 = inlined_call_operand.vmem [shape: bf16[256,256], index: 3, kind: input, shape index: {}]
  %s4 = inlined_call_operand.vmem [shape: f32[1,256], index: 4, kind: input, shape index: {}]
  %s5 = inlined_call_operand.vmem [shape: f32[1,128], index: 5, kind: input, shape index: {}]
  %s6 = inlined_call_operand.<no memory space> [shape: f32[1,1], index: 6, kind: input, shape index: {}]
  %s7 = inlined_call_operand.vmem [shape: f32[256,4], index: 7, kind: input, shape index: {}]
  %s8 = inlined_call_operand.vmem [shape: f32[1,4], index: 8, kind: input, shape index: {}]
  %s9 = inlined_call_operand.hbm [shape: f32[1,4], index: 9, kind: output, shape index: {0}]
  %s10 = inlined_call_operand.hbm [shape: f32[1,4], index: 10, kind: output, shape index: {1}]
  %s11 = inlined_call_operand.hbm [shape: s32[1,1], index: 11, kind: output, shape index: {2}]
  %s12 = inlined_call_operand.vmem [shape: f32[300,1], index: 12, kind: output, shape index: {3}]
  %13 = xla_tuple %s9, %s10, %s11, %s12
  %s14 = sld [smem:[#allocation0]]
  $region149: #{mil_attention_fc_surv_forward.1} parent=0
    _
  %s16 = ssub.s32 1, %s14
  %s17 = scalar_select 0, %s16, %s14
  %v18 = vstv %s6
  %19 = vst [vmem:[#allocation5] sm:$0x1] %v18
  $region1: #{mil_attention_fc_surv_forward.1} parent=0
    #allocation6 [shape = 'u8[512]{0}', space=vmem, size = 0x400, scoped, tag = 'output window, operand 0, single buffered']
    #allocation7 [shape = 's32[2]{0}', space=sflag, size = 0x8, scoped, tag = 'scoped memory for mil_attention_fc_surv_forward.1']
    #allocation8 [shape = 'u8[512]{0}', space=vmem, size = 0x400, scoped, tag = 'output window, operand 1, single buffered']
    #allocation9 [shape = 's32[1]{0}', space=sflag, size = 0x4, scoped, tag = 'scoped memory for mil_attention_fc_surv_forward.1']
    #allocation10 [shape = 'u8[512]{0}', space=vmem, size = 0x400, scoped, tag = 'output window, operand 2, single buffered']
    #allocation11 [shape = 'u8[131072]{0}', space=vmem, size = 0x20000, scoped, tag = 'output window, operand 3']
    %20 = vsyncpa [#allocation7], 0
    %21 = vsyncpa [#allocation9], 0
    loop: start=0, step=1, limit=5
    $region2: #{mil_attention_fc_surv_forward.1} parent=1 // loop_pre_header
      _
    $region3: #{mil_attention_fc_surv_forward.1} parent=1 // loop_header
      %s23 = sphi 0, %s27
      %p24 = scmp.ge.s32.totalorder %s23, 5
      %s33 = sphi 0, %s35
      %s36 = sphi 0, %s33
      %s37 = sphi 0, %s36
      %s53 = sphi 0, %s37
      %s57 = sphi 0, %s57
      %s59 = sphi 0, %s57
      %s60 = sphi 0, %s59
      %s74 = sphi 0, %s60
      %s78 = sphi 0, %s78
      %s80 = sphi 0, %s78
      %s81 = sphi 0, %s80
      %s95 = sphi 0, %s81
      %s99 = sphi 0, %s99
      %s101 = sphi 0, %s99
      %s102 = sphi 0, %s101
      %s116 = sphi 0, %s102
      %s120 = sphi 0, %s120
      %s122 = sphi 0, %s120
      %s123 = sphi 0, %s122
      %s137 = sphi 0, %s123
      %s141 = sphi 0, %s141
      %s143 = sphi 0, %s141
      %s144 = sphi 0, %s143
      %s158 = sphi 0, %s144
      %s162 = sphi 0, %s162
      %s164 = sphi 0, %s162
      %s165 = sphi 0, %s164
      %s179 = sphi 0, %s165
      %s183 = sphi 0, %s183
      %s185 = sphi 0, %s183
      %s186 = sphi 0, %s185
      %s200 = sphi 0, %s186
      %s204 = sphi 0, %s204
      %s206 = sphi 0, %s204
      %s207 = sphi 0, %s206
      %s221 = sphi 0, %s207
      %s225 = sphi 0, %s225
      %s227 = sphi 0, %s225
      %s228 = sphi 0, %s227
      %s242 = sphi 0, %s228
      %s246 = sphi 0, %s246
      %s248 = sphi 0, %s246
      %s249 = sphi 0, %s248
      %s263 = sphi 0, %s249
      %s267 = sphi 0, %s267
      %s269 = sphi 0, %s267
      %s270 = sphi 0, %s269
      %s284 = sphi 0, %s270
      %s290 = sphi 0, %s292
      %s293 = sphi 0, %s290
      %s294 = sphi 0, %s293
      %s310 = sphi 0, %s294
    $region4: #{mil_attention_fc_surv_forward.1} parent=1 // loop_header_branch
      %26 = sbr.rel (%p24) target = $region8
    $region5: #{mil_attention_fc_surv_forward.1} parent=1 // loop_body
      %s28 = ssub.s32 %s23, 1
      %s29 = ssub.s32 %s23, 2
      %s30 = sadd.s32 %s23, 1
      %s31 = ssub.s32 %s23, %s30
      %p32 = scmp.eq.s32.totalorder %s31, 0
      %s34 = sadd.s32 %s33, 1
      %s35 = scalar_select %p32, %s33, %s34
      %p38 = pneg %p32
      %p39 = scmp.eq.s32.totalorder %s23, 2
      %p40 = por %p38, %p39
      %p41 = scmp.ne.s32.totalorder %s33, %s36
      %p42 = scmp.eq.s32.totalorder %s23, 0
      %p43 = por %p41, %p42
      %p44 = scmp.ne.s32.totalorder %s33, %s36
      %p45 = scmp.eq.s32.totalorder %s28, 2
      %p46 = por %p44, %p45
      %p47 = scmp.ne.s32.totalorder %s36, %s37
      %p48 = scmp.eq.s32.totalorder %s28, 0
      %p49 = por %p47, %p48
      %p50 = scmp.ne.s32.totalorder %s36, %s37
      %p51 = scmp.eq.s32.totalorder %s29, 2
      %p52 = por %p50, %p51
      %p54 = scmp.ne.s32.totalorder %s37, %s53
      %p55 = scmp.eq.s32.totalorder %s29, 0
      %p56 = por %p54, %p55
      %s58 = sadd.s32 %s57, 1
      %p61 = scmp.eq.s32.totalorder %s23, 2
      %p62 = scmp.ne.s32.totalorder %s57, %s59
      %p63 = scmp.eq.s32.totalorder %s23, 0
      %p64 = por %p62, %p63
      %p65 = scmp.ne.s32.totalorder %s57, %s59
      %p66 = scmp.eq.s32.totalorder %s28, 2
      %p67 = por %p65, %p66
      %p68 = scmp.ne.s32.totalorder %s59, %s60
      %p69 = scmp.eq.s32.totalorder %s28, 0
      %p70 = por %p68, %p69
      %p71 = scmp.ne.s32.totalorder %s59, %s60
      %p72 = scmp.eq.s32.totalorder %s29, 2
      %p73 = por %p71, %p72
      %p75 = scmp.ne.s32.totalorder %s60, %s74
      %p76 = scmp.eq.s32.totalorder %s29, 0
      %p77 = por %p75, %p76
      %s79 = sadd.s32 %s78, 1
      %p82 = scmp.eq.s32.totalorder %s23, 2
      %p83 = scmp.ne.s32.totalorder %s78, %s80
      %p84 = scmp.eq.s32.totalorder %s23, 0
      %p85 = por %p83, %p84
      %p86 = scmp.ne.s32.totalorder %s78, %s80
      %p87 = scmp.eq.s32.totalorder %s28, 2
      %p88 = por %p86, %p87
      %p89 = scmp.ne.s32.totalorder %s80, %s81
      %p90 = scmp.eq.s32.totalorder %s28, 0
      %p91 = por %p89, %p90
      %p92 = scmp.ne.s32.totalorder %s80, %s81
      %p93 = scmp.eq.s32.totalorder %s29, 2
      %p94 = por %p92, %p93
      %p96 = scmp.ne.s32.totalorder %s81, %s95
      %p97 = scmp.eq.s32.totalorder %s29, 0
      %p98 = por %p96, %p97
      %s100 = sadd.s32 %s99, 1
      %p103 = scmp.eq.s32.totalorder %s23, 2
      %p104 = scmp.ne.s32.totalorder %s99, %s101
      %p105 = scmp.eq.s32.totalorder %s23, 0
      %p106 = por %p104, %p105
      %p107 = scmp.ne.s32.totalorder %s99, %s101
      %p108 = scmp.eq.s32.totalorder %s28, 2
      %p109 = por %p107, %p108
      %p110 = scmp.ne.s32.totalorder %s101, %s102
      %p111 = scmp.eq.s32.totalorder %s28, 0
      %p112 = por %p110, %p111
      %p113 = scmp.ne.s32.totalorder %s101, %s102
      %p114 = scmp.eq.s32.totalorder %s29, 2
      %p115 = por %p113, %p114
      %p117 = scmp.ne.s32.totalorder %s102, %s116
      %p118 = scmp.eq.s32.totalorder %s29, 0
      %p119 = por %p117, %p118
      %s121 = sadd.s32 %s120, 1
      %p124 = scmp.eq.s32.totalorder %s23, 2
      %p125 = scmp.ne.s32.totalorder %s120, %s122
      %p126 = scmp.eq.s32.totalorder %s23, 0
      %p127 = por %p125, %p126
      %p128 = scmp.ne.s32.totalorder %s120, %s122
      %p129 = scmp.eq.s32.totalorder %s28, 2
      %p130 = por %p128, %p129
      %p131 = scmp.ne.s32.totalorder %s122, %s123
      %p132 = scmp.eq.s32.totalorder %s28, 0
      %p133 = por %p131, %p132
      %p134 = scmp.ne.s32.totalorder %s122, %s123
      %p135 = scmp.eq.s32.totalorder %s29, 2
      %p136 = por %p134, %p135
      %p138 = scmp.ne.s32.totalorder %s123, %s137
      %p139 = scmp.eq.s32.totalorder %s29, 0
      %p140 = por %p138, %p139
      %s142 = sadd.s32 %s141, 1
      %p145 = scmp.eq.s32.totalorder %s23, 2
      %p146 = scmp.ne.s32.totalorder %s141, %s143
      %p147 = scmp.eq.s32.totalorder %s23, 0
      %p148 = por %p146, %p147
      %p149 = scmp.ne.s32.totalorder %s141, %s143
      %p150 = scmp.eq.s32.totalorder %s28, 2
      %p151 = por %p149, %p150
      %p152 = scmp.ne.s32.totalorder %s143, %s144
      %p153 = scmp.eq.s32.totalorder %s28, 0
      %p154 = por %p152, %p153
      %p155 = scmp.ne.s32.totalorder %s143, %s144
      %p156 = scmp.eq.s32.totalorder %s29, 2
      %p157 = por %p155, %p156
      %p159 = scmp.ne.s32.totalorder %s144, %s158
      %p160 = scmp.eq.s32.totalorder %s29, 0
      %p161 = por %p159, %p160
      %s163 = sadd.s32 %s162, 1
      %p166 = scmp.eq.s32.totalorder %s23, 2
      %p167 = scmp.ne.s32.totalorder %s162, %s164
      %p168 = scmp.eq.s32.totalorder %s23, 0
      %p169 = por %p167, %p168
      %p170 = scmp.ne.s32.totalorder %s162, %s164
      %p171 = scmp.eq.s32.totalorder %s28, 2
      %p172 = por %p170, %p171
      %p173 = scmp.ne.s32.totalorder %s164, %s165
      %p174 = scmp.eq.s32.totalorder %s28, 0
      %p175 = por %p173, %p174
      %p176 = scmp.ne.s32.totalorder %s164, %s165
      %p177 = scmp.eq.s32.totalorder %s29, 2
      %p178 = por %p176, %p177
      %p180 = scmp.ne.s32.totalorder %s165, %s179
      %p181 = scmp.eq.s32.totalorder %s29, 0
      %p182 = por %p180, %p181
      %s184 = sadd.s32 %s183, 1
      %p187 = scmp.eq.s32.totalorder %s23, 2
      %p188 = scmp.ne.s32.totalorder %s183, %s185
      %p189 = scmp.eq.s32.totalorder %s23, 0
      %p190 = por %p188, %p189
      %p191 = scmp.ne.s32.totalorder %s183, %s185
      %p192 = scmp.eq.s32.totalorder %s28, 2
      %p193 = por %p191, %p192
      %p194 = scmp.ne.s32.totalorder %s185, %s186
      %p195 = scmp.eq.s32.totalorder %s28, 0
      %p196 = por %p194, %p195
      %p197 = scmp.ne.s32.totalorder %s185, %s186
      %p198 = scmp.eq.s32.totalorder %s29, 2
      %p199 = por %p197, %p198
      %p201 = scmp.ne.s32.totalorder %s186, %s200
      %p202 = scmp.eq.s32.totalorder %s29, 0
      %p203 = por %p201, %p202
      %s205 = sadd.s32 %s204, 1
      %p208 = scmp.eq.s32.totalorder %s23, 2
      %p209 = scmp.ne.s32.totalorder %s204, %s206
      %p210 = scmp.eq.s32.totalorder %s23, 0
      %p211 = por %p209, %p210
      %p212 = scmp.ne.s32.totalorder %s204, %s206
      %p213 = scmp.eq.s32.totalorder %s28, 2
      %p214 = por %p212, %p213
      %p215 = scmp.ne.s32.totalorder %s206, %s207
      %p216 = scmp.eq.s32.totalorder %s28, 0
      %p217 = por %p215, %p216
      %p218 = scmp.ne.s32.totalorder %s206, %s207
      %p219 = scmp.eq.s32.totalorder %s29, 2
      %p220 = por %p218, %p219
      %p222 = scmp.ne.s32.totalorder %s207, %s221
      %p223 = scmp.eq.s32.totalorder %s29, 0
      %p224 = por %p222, %p223
      %s226 = sadd.s32 %s225, 1
      %p229 = scmp.eq.s32.totalorder %s23, 2
      %p230 = scmp.ne.s32.totalorder %s225, %s227
      %p231 = scmp.eq.s32.totalorder %s23, 0
      %p232 = por %p230, %p231
      %p233 = scmp.ne.s32.totalorder %s225, %s227
      %p234 = scmp.eq.s32.totalorder %s28, 2
      %p235 = por %p233, %p234
      %p236 = scmp.ne.s32.totalorder %s227, %s228
      %p237 = scmp.eq.s32.totalorder %s28, 0
      %p238 = por %p236, %p237
      %p239 = scmp.ne.s32.totalorder %s227, %s228
      %p240 = scmp.eq.s32.totalorder %s29, 2
      %p241 = por %p239, %p240
      %p243 = scmp.ne.s32.totalorder %s228, %s242
      %p244 = scmp.eq.s32.totalorder %s29, 0
      %p245 = por %p243, %p244
      %s247 = sadd.s32 %s246, 1
      %p250 = scmp.eq.s32.totalorder %s23, 2
      %p251 = scmp.ne.s32.totalorder %s246, %s248
      %p252 = scmp.eq.s32.totalorder %s23, 0
      %p253 = por %p251, %p252
      %p254 = scmp.ne.s32.totalorder %s246, %s248
      %p255 = scmp.eq.s32.totalorder %s28, 2
      %p256 = por %p254, %p255
      %p257 = scmp.ne.s32.totalorder %s248, %s249
      %p258 = scmp.eq.s32.totalorder %s28, 0
      %p259 = por %p257, %p258
      %p260 = scmp.ne.s32.totalorder %s248, %s249
      %p261 = scmp.eq.s32.totalorder %s29, 2
      %p262 = por %p260, %p261
      %p264 = scmp.ne.s32.totalorder %s249, %s263
      %p265 = scmp.eq.s32.totalorder %s29, 0
      %p266 = por %p264, %p265
      %s268 = sadd.s32 %s267, 1
      %p271 = scmp.eq.s32.totalorder %s23, 2
      %p272 = scmp.ne.s32.totalorder %s267, %s269
      %p273 = scmp.eq.s32.totalorder %s23, 0
      %p274 = por %p272, %p273
      %p275 = scmp.ne.s32.totalorder %s267, %s269
      %p276 = scmp.eq.s32.totalorder %s28, 2
      %p277 = por %p275, %p276
      %p278 = scmp.ne.s32.totalorder %s269, %s270
      %p279 = scmp.eq.s32.totalorder %s28, 0
      %p280 = por %p278, %p279
      %p281 = scmp.ne.s32.totalorder %s269, %s270
      %p282 = scmp.eq.s32.totalorder %s29, 2
      %p283 = por %p281, %p282
      %p285 = scmp.ne.s32.totalorder %s270, %s284
      %p286 = scmp.eq.s32.totalorder %s29, 0
      %p287 = por %p285, %p286
      %s288 = ssub.s32 %s23, %s30
      %p289 = scmp.eq.s32.totalorder %s288, 0
      %s291 = sadd.s32 %s290, 1
      %s292 = scalar_select %p289, %s290, %s291
      %p295 = pneg %p289
      %p296 = scmp.eq.s32.totalorder %s23, 2
      %p297 = por %p295, %p296
      %p298 = scmp.ne.s32.totalorder %s290, %s293
      %p299 = scmp.eq.s32.totalorder %s23, 0
      %p300 = por %p298, %p299
      %p301 = scmp.ne.s32.totalorder %s290, %s293
      %p302 = scmp.eq.s32.totalorder %s28, 2
      %p303 = por %p301, %p302
      %p304 = scmp.ne.s32.totalorder %s293, %s294
      %p305 = scmp.eq.s32.totalorder %s28, 0
      %p306 = por %p304, %p305
      %p307 = scmp.ne.s32.totalorder %s293, %s294
      %p308 = scmp.eq.s32.totalorder %s29, 2
      %p309 = por %p307, %p308
      %p311 = scmp.ne.s32.totalorder %s294, %s310
      %p312 = scmp.eq.s32.totalorder %s29, 0
      %p313 = por %p311, %p312
      %p314 = scmp.le.s32.totalorder 1, %s23
      %p315 = scmp.lt.s32.totalorder %s23, 4
      %p316 = pnand %p314, %p315
      %p317 = pneg %p316
      // Predicated region
      $region9: #{mil_attention_fc_surv_forward.1} parent=5 // pred_check
        _
      $region10: #{mil_attention_fc_surv_forward.1} parent=5 // pred_check_branch
        %319 = sbr.rel (%p316) target = $region12
      $region11: #{mil_attention_fc_surv_forward.1} parent=5 // pred_region
        %s320 = ssub.s32 %s23, 1
        // Predicated region
        $region13: #{mil_attention_fc_surv_forward.1} parent=11 // pred_check
          %p321 = pneg %p70
        $region14: #{mil_attention_fc_surv_forward.1} parent=11 // pred_check_branch
          %323 = sbr.rel (%p321) target = $region16
        $region15: #{mil_attention_fc_surv_forward.1} parent=11 // pred_region
          _
        $region16: #{mil_attention_fc_surv_forward.1} parent=11 // pred_fallthru
          _
        // Predicated region
        $region17: #{mil_attention_fc_surv_forward.1} parent=11 // pred_check
          %p324 = pneg %p91
        $region18: #{mil_attention_fc_surv_forward.1} parent=11 // pred_check_branch
          %326 = sbr.rel (%p324) target = $region20
        $region19: #{mil_attention_fc_surv_forward.1} parent=11 // pred_region
          _
        $region20: #{mil_attention_fc_surv_forward.1} parent=11 // pred_fallthru
          _
        // Predicated region
        $region21: #{mil_attention_fc_surv_forward.1} parent=11 // pred_check
          %p327 = pneg %p112
        $region22: #{mil_attention_fc_surv_forward.1} parent=11 // pred_check_branch
          %329 = sbr.rel (%p327) target = $region24
        $region23: #{mil_attention_fc_surv_forward.1} parent=11 // pred_region
          _
        $region24: #{mil_attention_fc_surv_forward.1} parent=11 // pred_fallthru
          _
        // Predicated region
        $region25: #{mil_attention_fc_surv_forward.1} parent=11 // pred_check
          %p330 = pneg %p133
        $region26: #{mil_attention_fc_surv_forward.1} parent=11 // pred_check_branch
          %332 = sbr.rel (%p330) target = $region28
        $region27: #{mil_attention_fc_surv_forward.1} parent=11 // pred_region
          _
        $region28: #{mil_attention_fc_surv_forward.1} parent=11 // pred_fallthru
          _
        // Predicated region
        $region29: #{mil_attention_fc_surv_forward.1} parent=11 // pred_check
          %p333 = pneg %p154
        $region30: #{mil_attention_fc_surv_forward.1} parent=11 // pred_check_branch
          %335 = sbr.rel (%p333) target = $region32
        $region31: #{mil_attention_fc_surv_forward.1} parent=11 // pred_region
          _
        $region32: #{mil_attention_fc_surv_forward.1} parent=11 // pred_fallthru
          _
        // Predicated region
        $region33: #{mil_attention_fc_surv_forward.1} parent=11 // pred_check
          %p336 = pneg %p175
        $region34: #{mil_attention_fc_surv_forward.1} parent=11 // pred_check_branch
          %338 = sbr.rel (%p336) target = $region36
        $region35: #{mil_attention_fc_surv_forward.1} parent=11 // pred_region
          _
        $region36: #{mil_attention_fc_surv_forward.1} parent=11 // pred_fallthru
          _
        // Predicated region
        $region37: #{mil_attention_fc_surv_forward.1} parent=11 // pred_check
          %p339 = pneg %p196
        $region38: #{mil_attention_fc_surv_forward.1} parent=11 // pred_check_branch
          %341 = sbr.rel (%p339) target = $region40
        $region39: #{mil_attention_fc_surv_forward.1} parent=11 // pred_region
          _
        $region40: #{mil_attention_fc_surv_forward.1} parent=11 // pred_fallthru
          _
        // Predicated region
        $region41: #{mil_attention_fc_surv_forward.1} parent=11 // pred_check
          %p342 = pneg %p217
        $region42: #{mil_attention_fc_surv_forward.1} parent=11 // pred_check_branch
          %344 = sbr.rel (%p342) target = $region44
        $region43: #{mil_attention_fc_surv_forward.1} parent=11 // pred_region
          _
        $region44: #{mil_attention_fc_surv_forward.1} parent=11 // pred_fallthru
          _
      $region12: #{mil_attention_fc_surv_forward.1} parent=5 // pred_fallthru
        _
      %p345 = scmp.lt.s32.totalorder %s23, 3
      // Predicated region
      $region45: #{mil_attention_fc_surv_forward.1} parent=5 // pred_check
        %p346 = pneg %p345
      $region46: #{mil_attention_fc_surv_forward.1} parent=5 // pred_check_branch
        %348 = sbr.rel (%p346) target = $region48
      $region47: #{mil_attention_fc_surv_forward.1} parent=5 // pred_region
        // Predicated region
        $region49: #{mil_attention_fc_surv_forward.1} parent=47 // pred_check
          %p349 = pneg %p43
        $region50: #{mil_attention_fc_surv_forward.1} parent=47 // pred_check_branch
          %351 = sbr.rel (%p349) target = $region52
        $region51: #{mil_attention_fc_surv_forward.1} parent=47 // pred_region
          %s352 = smul.u32 16, %s23
          %s353 = ssub.s32 38, %s352
          %p354 = scmp.lt.s32.totalorder %s353, 16
          %s355 = scalar_select %p354, %s353, 16
          %s356 = smul.u32 4, %s355
          %s357 = smul.u32 %s356, 2
          %p358 = scmp.lt.s32.totalorder %s352, 37
          %s359 = scalar_select %p358, %s352, 37
          %s360 = smul.addr %s359, 2
          %s361 = smul.addr %s360, 4
          %s362 = scalar_lea.vmem %s0, %s361
          %s363 = smul.u32 16, %s23
          %s364 = ssub.s32 38, %s363
          %p365 = scmp.lt.s32.totalorder %s364, 16
          %s366 = scalar_select %p365, %s364, 16
          %s367 = smul.u32 4, %s366
          %s368 = smul.u32 %s367, 2
        $region52: #{mil_attention_fc_surv_forward.1} parent=47 // pred_fallthru
          _
      $region48: #{mil_attention_fc_surv_forward.1} parent=5 // pred_fallthru
        _
      %p369 = scmp.le.s32.totalorder 1, %s23
      %p370 = scmp.lt.s32.totalorder %s23, 4
      %p371 = pnand %p369, %p370
      %p372 = pneg %p371
      // Predicated region
      $region53: #{mil_attention_fc_surv_forward.1} parent=5 // pred_check
        _
      $region54: #{mil_attention_fc_surv_forward.1} parent=5 // pred_check_branch
        %374 = sbr.rel (%p371) target = $region56
      $region55: #{mil_attention_fc_surv_forward.1} parent=5 // pred_region
        %s375 = ssub.s32 %s23, 1
        %s376 = smul.u32 16, %s28
        %s377 = ssub.s32 38, %s376
        %p378 = scmp.lt.s32.totalorder %s377, 16
        %s379 = scalar_select %p378, %s377, 16
        %s380 = smul.u32 4, %s379
        %s381 = smul.u32 %s380, 2
        %p382 = scmp.lt.s32.totalorder %s376, 37
        %s383 = scalar_select %p382, %s376, 37
        %s384 = smul.addr %s383, 2
        %s385 = smul.addr %s384, 4
        %s386 = scalar_lea.vmem %s0, %s385
        %p387 = pneg %p49
        %p388 = pneg %p46
        %p389 = pneg %p70
        %p390 = pneg %p67
        %p391 = pneg %p91
        %p392 = pneg %p88
        %p393 = pneg %p112
        %p394 = pneg %p109
        %p395 = pneg %p133
        %p396 = pneg %p130
        %p397 = pneg %p154
        %p398 = pneg %p151
        %p399 = pneg %p175
        %p400 = pneg %p172
        %p401 = pneg %p196
        %p402 = pneg %p193
        %p403 = pneg %p217
        %p404 = pneg %p214
        %p405 = pneg %p238
        %p406 = pneg %p235
        %p407 = pneg %p259
        %p408 = pneg %p256
        %p409 = pneg %p280
        %p410 = pneg %p277
        %p411 = pneg %p306
        %p412 = pneg %p303
        %s413 = sand.u32 %s293, 1
        %s414 = sand.u32 %s293, 1
        %s415 = smul.addr %s414, 128
        %s416 = scalar_lea.vmem [#allocation11], %s415
        %s417 = smul.u32 16, %s28
        %s418 = ssub.s32 38, %s417
        %p419 = scmp.lt.s32.totalorder %s418, 16
        %s420 = scalar_select %p419, %s418, 16
        %s421 = smul.u32 4, %s420
        %s422 = smul.u32 %s421, 2
        %p423 = scmp.lt.s32.totalorder %s417, 37
        %s424 = scalar_select %p423, %s417, 37
        %s425 = smul.addr %s424, 2
        %s426 = smul.addr %s425, 4
        %s427 = scalar_lea.vmem %s0, %s426
        %s428 = smul.u32 16, %s28
        %s429 = ssub.s32 38, %s428
        %p430 = scmp.lt.s32.totalorder %s429, 16
        %s431 = scalar_select %p430, %s429, 16
        %s432 = smul.u32 4, %s431
        %s433 = smul.u32 %s432, 2
        %s434 = smul.u32 16, %s28
        %s435 = ssub.s32 38, %s434
        %p436 = scmp.lt.s32.totalorder %s435, 16
        %s437 = scalar_select %p436, %s435, 16
        %s438 = smul.u32 8, %s437
        %p439 = scmp.eq.s32.totalorder %s28, 0
        // Predicated region
        $region57: #{mil_attention_fc_surv_forward.1} parent=55 // pred_check
          %p440 = pneg %p439
        $region58: #{mil_attention_fc_surv_forward.1} parent=55 // pred_check_branch
          %442 = sbr.rel (%p440) target = $region60
        $region59: #{mil_attention_fc_surv_forward.1} parent=55 // pred_region
          %vm443 = vcmask 0
          %444 = vst.msk [vmem:[#allocation2] sm:$0x1] %vm443, -inf
          %445 = vst.msk [vmem:[#allocation3] sm:$0x1] %vm443, 0.0
          %v446 = vlaneseq
          %vm447 = vcmp.ge.s32.totalorder %v446, 0
          %vm448 = vcmp.lt.s32.totalorder %v446, 256
          %vm449 = vmand %vm447, %vm448
          %450 = vst.msk [vmem:[#allocation4] sm:$0x3] %vm449, 0.0
        $region60: #{mil_attention_fc_surv_forward.1} parent=55 // pred_fallthru
          _
        %v451 = vlaneseq
        %v452 = vshrl.u32 %v451, 7
        %v453 = vadd.s32 %v452, 8
        %v454 = vadd.s32 %v452, 16
        %v455 = vadd.s32 %v452, 24
        %v456 = vadd.s32 %v452, 32
        %v457 = vadd.s32 %v452, 40
        %v458 = vadd.s32 %v452, 48
        %v459 = vadd.s32 %v452, 56
        %v460 = vadd.s32 %v452, 64
        %v461 = vadd.s32 %v452, 72
        %v462 = vadd.s32 %v452, 80
        %v463 = vadd.s32 %v452, 88
        %v464 = vadd.s32 %v452, 96
        %v465 = vadd.s32 %v452, 104
        %v466 = vadd.s32 %v452, 112
        %v467 = vadd.s32 %v452, 120
        %s468 = smul.u32 %s28, 128
        %v469 = vstv %s468
        %v470 = vadd.s32 %v452, %v469
        %v471 = vadd.s32 %v453, %v469
        %v472 = vadd.s32 %v454, %v469
        %v473 = vadd.s32 %v455, %v469
        %v474 = vadd.s32 %v456, %v469
        %v475 = vadd.s32 %v457, %v469
        %v476 = vadd.s32 %v458, %v469
        %v477 = vadd.s32 %v459, %v469
        %v478 = vadd.s32 %v460, %v469
        %v479 = vadd.s32 %v461, %v469
        %v480 = vadd.s32 %v462, %v469
        %v481 = vadd.s32 %v463, %v469
        %v482 = vadd.s32 %v464, %v469
        %v483 = vadd.s32 %v465, %v469
        %v484 = vadd.s32 %v466, %v469
        %v485 = vadd.s32 %v467, %v469
        %vm486 = vcmp.lt.s32.totalorder %v470, 300
        %vm487 = vcmp.lt.s32.totalorder %v471, 300
        %vm488 = vcmp.lt.s32.totalorder %v472, 300
        %vm489 = vcmp.lt.s32.totalorder %v473, 300
        %vm490 = vcmp.lt.s32.totalorder %v474, 300
        %vm491 = vcmp.lt.s32.totalorder %v475, 300
        %vm492 = vcmp.lt.s32.totalorder %v476, 300
        %vm493 = vcmp.lt.s32.totalorder %v477, 300
        %vm494 = vcmp.lt.s32.totalorder %v478, 300
        %vm495 = vcmp.lt.s32.totalorder %v479, 300
        %vm496 = vcmp.lt.s32.totalorder %v480, 300
        %vm497 = vcmp.lt.s32.totalorder %v481, 300
        %vm498 = vcmp.lt.s32.totalorder %v482, 300
        %vm499 = vcmp.lt.s32.totalorder %v483, 300
        %vm500 = vcmp.lt.s32.totalorder %v484, 300
        %vm501 = vcmp.lt.s32.totalorder %v485, 300
        %v502 = vld [vmem:[%s427] sm:$0xff]
        %v503 = vld [vmem:[%s427 + $0x8] sm:$0xff]
        %v504 = vld [vmem:[%s427 + $0x10] sm:$0xff]
        %v505 = vld [vmem:[%s427 + $0x18] sm:$0xff]
        %v506 = vld [vmem:[%s427 + $0x20] sm:$0xff]
        %v507 = vld [vmem:[%s427 + $0x28] sm:$0xff]
        %v508 = vld [vmem:[%s427 + $0x30] sm:$0xff]
        %v509 = vld [vmem:[%s427 + $0x38] sm:$0xff]
        %v510 = vld [vmem:[%s427 + $0x40] sm:$0xff]
        %v511 = vld [vmem:[%s427 + $0x48] sm:$0xff]
        %v512 = vld [vmem:[%s427 + $0x50] sm:$0xff]
        %v513 = vld [vmem:[%s427 + $0x58] sm:$0xff]
        %v514 = vld [vmem:[%s427 + $0x60] sm:$0xff]
        %v515 = vld [vmem:[%s427 + $0x68] sm:$0xff]
        %v516 = vld [vmem:[%s427 + $0x70] sm:$0xff]
        %v517 = vld [vmem:[%s427 + $0x78] sm:$0xff]
        %v518 = vld [vmem:[%s1] sm:$0xff]
        %v519 = vld [vmem:[%s1 + $0x8] sm:$0xff]
        %v520 = vld [vmem:[%s1 + $0x10] sm:$0xff]
        %v521 = vld [vmem:[%s1 + $0x18] sm:$0xff]
        %v522 = vld [vmem:[%s1 + $0x20] sm:$0xff]
        %v523 = vld [vmem:[%s1 + $0x28] sm:$0xff]
        %v524 = vld [vmem:[%s1 + $0x30] sm:$0xff]
        %v525 = vld [vmem:[%s1 + $0x38] sm:$0xff]
        %v526 = vld [vmem:[%s1 + $0x40] sm:$0xff]
        %v527 = vld [vmem:[%s1 + $0x48] sm:$0xff]
        %v528 = vld [vmem:[%s1 + $0x50] sm:$0xff]
        %v529 = vld [vmem:[%s1 + $0x58] sm:$0xff]
        %v530 = vld [vmem:[%s1 + $0x60] sm:$0xff]
        %v531 = vld [vmem:[%s1 + $0x68] sm:$0xff]
        %v532 = vld [vmem:[%s1 + $0x70] sm:$0xff]
        %v533 = vld [vmem:[%s1 + $0x78] sm:$0xff]
        %v534 = vld [vmem:[%s1 + $0x80] sm:$0xff]
        %v535 = vld [vmem:[%s1 + $0x88] sm:$0xff]
        %v536 = vld [vmem:[%s1 + $0x90] sm:$0xff]
        %v537 = vld [vmem:[%s1 + $0x98] sm:$0xff]
        %v538 = vld [vmem:[%s1 + $0xa0] sm:$0xff]
        %v539 = vld [vmem:[%s1 + $0xa8] sm:$0xff]
        %v540 = vld [vmem:[%s1 + $0xb0] sm:$0xff]
        %v541 = vld [vmem:[%s1 + $0xb8] sm:$0xff]
        %v542 = vld [vmem:[%s1 + $0xc0] sm:$0xff]
        %v543 = vld [vmem:[%s1 + $0xc8] sm:$0xff]
        %v544 = vld [vmem:[%s1 + $0xd0] sm:$0xff]
        %v545 = vld [vmem:[%s1 + $0xd8] sm:$0xff]
        %v546 = vld [vmem:[%s1 + $0xe0] sm:$0xff]
        %v547 = vld [vmem:[%s1 + $0xe8] sm:$0xff]
        %v548 = vld [vmem:[%s1 + $0xf0] sm:$0xff]
        %v549 = vld [vmem:[%s1 + $0xf8] sm:$0xff]
        %v550 = vld [vmem:[%s2] sm:$0x3]
        %v552 = vperm.slane %v550, 0
        %v553 = vperm.slane %v550, 1
        %v572 = vunpack.c.l.b16 %v502
        %v573 = vunpack.c.h.b16 %v502
        %v574 = vunpack.c.l.b16 %v503
        %v575 = vunpack.c.h.b16 %v503
        %v576 = vunpack.c.l.b16 %v504
        %v577 = vunpack.c.h.b16 %v504
        %v578 = vunpack.c.l.b16 %v505
        %v579 = vunpack.c.h.b16 %v505
        %v580 = vunpack.c.l.b16 %v506
        %v581 = vunpack.c.h.b16 %v506
        %v582 = vunpack.c.l.b16 %v507
        %v583 = vunpack.c.h.b16 %v507
        %v584 = vunpack.c.l.b16 %v508
        %v585 = vunpack.c.h.b16 %v508
        %v586 = vunpack.c.l.b16 %v509
        %v587 = vunpack.c.h.b16 %v509
        %v588 = vunpack.c.l.b16 %v510
        %v589 = vunpack.c.h.b16 %v510
        %v590 = vunpack.c.l.b16 %v511
        %v591 = vunpack.c.h.b16 %v511
        %v592 = vunpack.c.l.b16 %v512
        %v593 = vunpack.c.h.b16 %v512
        %v594 = vunpack.c.l.b16 %v513
        %v595 = vunpack.c.h.b16 %v513
        %v596 = vunpack.c.l.b16 %v514
        %v597 = vunpack.c.h.b16 %v514
        %v598 = vunpack.c.l.b16 %v515
        %v599 = vunpack.c.h.b16 %v515
        %v600 = vunpack.c.l.b16 %v516
        %v601 = vunpack.c.h.b16 %v516
        %v602 = vunpack.c.l.b16 %v517
        %v603 = vunpack.c.h.b16 %v517
        %v604 = vpack.c.b16 %v574, %v572
        %v605 = vpack.c.b16 %v575, %v573
        %v606 = vpack.c.b16 %v578, %v576
        %v607 = vpack.c.b16 %v579, %v577
        %v608 = vpack.c.b16 %v582, %v580
        %v609 = vpack.c.b16 %v583, %v581
        %v610 = vpack.c.b16 %v586, %v584
        %v611 = vpack.c.b16 %v587, %v585
        %v612 = vpack.c.b16 %v590, %v588
        %v613 = vpack.c.b16 %v591, %v589
        %v614 = vpack.c.b16 %v594, %v592
        %v615 = vpack.c.b16 %v595, %v593
        %v616 = vpack.c.b16 %v598, %v596
        %v617 = vpack.c.b16 %v599, %v597
        %v618 = vpack.c.b16 %v602, %v600
        %v619 = vpack.c.b16 %v603, %v601
        %v668 = vunpack.c.l.b16 %v518
        %v669 = vunpack.c.h.b16 %v518
        %v670 = vunpack.c.l.b16 %v519
        %v671 = vunpack.c.h.b16 %v519
        %v672 = vunpack.c.l.b16 %v520
        %v673 = vunpack.c.h.b16 %v520
        %v674 = vunpack.c.l.b16 %v521
        %v675 = vunpack.c.h.b16 %v521
        %v676 = vunpack.c.l.b16 %v522
        %v677 = vunpack.c.h.b16 %v522
        %v678 = vunpack.c.l.b16 %v523
        %v679 = vunpack.c.h.b16 %v523
        %v680 = vunpack.c.l.b16 %v524
        %v681 = vunpack.c.h.b16 %v524
        %v682 = vunpack.c.l.b16 %v525
        %v683 = vunpack.c.h.b16 %v525
        %v684 = vunpack.c.l.b16 %v526
        %v685 = vunpack.c.h.b16 %v526
        %v686 = vunpack.c.l.b16 %v527
        %v687 = vunpack.c.h.b16 %v527
        %v688 = vunpack.c.l.b16 %v528
        %v689 = vunpack.c.h.b16 %v528
        %v690 = vunpack.c.l.b16 %v529
        %v691 = vunpack.c.h.b16 %v529
        %v692 = vunpack.c.l.b16 %v530
        %v693 = vunpack.c.h.b16 %v530
        %v694 = vunpack.c.l.b16 %v531
        %v695 = vunpack.c.h.b16 %v531
        %v696 = vunpack.c.l.b16 %v532
        %v697 = vunpack.c.h.b16 %v532
        %v698 = vunpack.c.l.b16 %v533
        %v699 = vunpack.c.h.b16 %v533
        %v700 = vunpack.c.l.b16 %v534
        %v701 = vunpack.c.h.b16 %v534
        %v702 = vunpack.c.l.b16 %v535
        %v703 = vunpack.c.h.b16 %v535
        %v704 = vunpack.c.l.b16 %v536
        %v705 = vunpack.c.h.b16 %v536
        %v706 = vunpack.c.l.b16 %v537
        %v707 = vunpack.c.h.b16 %v537
        %v708 = vunpack.c.l.b16 %v538
        %v709 = vunpack.c.h.b16 %v538
        %v710 = vunpack.c.l.b16 %v539
        %v711 = vunpack.c.h.b16 %v539
        %v712 = vunpack.c.l.b16 %v540
        %v713 = vunpack.c.h.b16 %v540
        %v714 = vunpack.c.l.b16 %v541
        %v715 = vunpack.c.h.b16 %v541
        %v716 = vunpack.c.l.b16 %v542
        %v717 = vunpack.c.h.b16 %v542
        %v718 = vunpack.c.l.b16 %v543
        %v719 = vunpack.c.h.b16 %v543
        %v720 = vunpack.c.l.b16 %v544
        %v721 = vunpack.c.h.b16 %v544
        %v722 = vunpack.c.l.b16 %v545
        %v723 = vunpack.c.h.b16 %v545
        %v724 = vunpack.c.l.b16 %v546
        %v725 = vunpack.c.h.b16 %v546
        %v726 = vunpack.c.l.b16 %v547
        %v727 = vunpack.c.h.b16 %v547
        %v728 = vunpack.c.l.b16 %v548
        %v729 = vunpack.c.h.b16 %v548
        %v730 = vunpack.c.l.b16 %v549
        %v731 = vunpack.c.h.b16 %v549
        %v732 = vpack.c.b16 %v670, %v668
        %v733 = vpack.c.b16 %v671, %v669
        %v734 = vpack.c.b16 %v674, %v672
        %v735 = vpack.c.b16 %v675, %v673
        %v736 = vpack.c.b16 %v678, %v676
        %v737 = vpack.c.b16 %v679, %v677
        %v738 = vpack.c.b16 %v682, %v680
        %v739 = vpack.c.b16 %v683, %v681
        %v740 = vpack.c.b16 %v686, %v684
        %v741 = vpack.c.b16 %v687, %v685
        %v742 = vpack.c.b16 %v690, %v688
        %v743 = vpack.c.b16 %v691, %v689
        %v744 = vpack.c.b16 %v694, %v692
        %v745 = vpack.c.b16 %v695, %v693
        %v746 = vpack.c.b16 %v698, %v696
        %v747 = vpack.c.b16 %v699, %v697
        %v748 = vpack.c.b16 %v702, %v700
        %v749 = vpack.c.b16 %v703, %v701
        %v750 = vpack.c.b16 %v706, %v704
        %v751 = vpack.c.b16 %v707, %v705
        %v752 = vpack.c.b16 %v710, %v708
        %v753 = vpack.c.b16 %v711, %v709
        %v754 = vpack.c.b16 %v714, %v712
        %v755 = vpack.c.b16 %v715, %v713
        %v756 = vpack.c.b16 %v718, %v716
        %v757 = vpack.c.b16 %v719, %v717
        %v758 = vpack.c.b16 %v722, %v720
        %v759 = vpack.c.b16 %v723, %v721
        %v760 = vpack.c.b16 %v726, %v724
        %v761 = vpack.c.b16 %v727, %v725
        %v762 = vpack.c.b16 %v730, %v728
        %v763 = vpack.c.b16 %v731, %v729
        %796 = vmatpush.bf16.msra.mxu0 %v746
        %797 = vmatpush.bf16.msra.mxu0 %v744
        %798 = vmatpush.bf16.msra.mxu0 %v742
        %799 = vmatpush.bf16.msra.mxu0 %v740
        %800 = vmatpush.bf16.msra.mxu0 %v738
        %801 = vmatpush.bf16.msra.mxu0 %v736
        %802 = vmatpush.bf16.msra.mxu0 %v734
        %803 = vmatpush.bf16.msra.mxu0 %v732
        %804 = vmatmul.bf16.gmra.mxu0 %v604
        %v805 = vpop.f32.mrf.mxu0
        %v806 = vadd.f32 %v552, %v805
        %v807 = vpop.f32.mrf.mxu0
        %v808 = vadd.f32 %v552, %v807
        %809 = vmatmul.bf16.gmra.mxu0 %v606
        %v810 = vpop.f32.mrf.mxu0
        %v811 = vadd.f32 %v552, %v810
        %v812 = vpop.f32.mrf.mxu0
        %v813 = vadd.f32 %v552, %v812
        %814 = vmatmul.bf16.gmra.mxu0 %v608
        %v815 = vpop.f32.mrf.mxu0
        %v816 = vadd.f32 %v552, %v815
        %v817 = vpop.f32.mrf.mxu0
        %v818 = vadd.f32 %v552, %v817
        %819 = vmatmul.bf16.gmra.mxu0 %v610
        %v820 = vpop.f32.mrf.mxu0
        %v821 = vadd.f32 %v552, %v820
        %v822 = vpop.f32.mrf.mxu0
        %v823 = vadd.f32 %v552, %v822
        %824 = vmatmul.bf16.gmra.mxu0 %v612
        %v825 = vpop.f32.mrf.mxu0
        %v826 = vadd.f32 %v552, %v825
        %v827 = vpop.f32.mrf.mxu0
        %v828 = vadd.f32 %v552, %v827
        %829 = vmatmul.bf16.gmra.mxu0 %v614
        %v830 = vpop.f32.mrf.mxu0
        %v831 = vadd.f32 %v552, %v830
        %v832 = vpop.f32.mrf.mxu0
        %v833 = vadd.f32 %v552, %v832
        %834 = vmatmul.bf16.gmra.mxu0 %v616
        %v835 = vpop.f32.mrf.mxu0
        %v836 = vadd.f32 %v552, %v835
        %v837 = vpop.f32.mrf.mxu0
        %v838 = vadd.f32 %v552, %v837
        %839 = vmatmul.bf16.gmra.mxu0 %v618
        %v840 = vpop.f32.mrf.mxu0
        %v841 = vadd.f32 %v552, %v840
        %v842 = vpop.f32.mrf.mxu0
        %v843 = vadd.f32 %v552, %v842
        %844 = vdwg.mxu0
        %845 = vmatpush.bf16.msra.mxu0 %v762
        %846 = vmatpush.bf16.msra.mxu0 %v760
        %847 = vmatpush.bf16.msra.mxu0 %v758
        %848 = vmatpush.bf16.msra.mxu0 %v756
        %849 = vmatpush.bf16.msra.mxu0 %v754
        %850 = vmatpush.bf16.msra.mxu0 %v752
        %851 = vmatpush.bf16.msra.mxu0 %v750
        %852 = vmatpush.bf16.msra.mxu0 %v748
        %853 = vmatmul.bf16.gmra.mxu0 %v605
        %v854 = vpop.f32.mrf.mxu0
        %v855 = vadd.f32 %v806, %v854
        %v856 = vpop.f32.mrf.mxu0
        %v857 = vadd.f32 %v808, %v856
        %858 = vmatmul.bf16.gmra.mxu0 %v607
        %v859 = vpop.f32.mrf.mxu0
        %v860 = vadd.f32 %v811, %v859
        %v861 = vpop.f32.mrf.mxu0
        %v862 = vadd.f32 %v813, %v861
        %863 = vmatmul.bf16.gmra.mxu0 %v609
        %v864 = vpop.f32.mrf.mxu0
        %v865 = vadd.f32 %v816, %v864
        %v866 = vpop.f32.mrf.mxu0
        %v867 = vadd.f32 %v818, %v866
        %868 = vmatmul.bf16.gmra.mxu0 %v611
        %v869 = vpop.f32.mrf.mxu0
        %v870 = vadd.f32 %v821, %v869
        %v871 = vpop.f32.mrf.mxu0
        %v872 = vadd.f32 %v823, %v871
        %873 = vmatmul.bf16.gmra.mxu0 %v613
        %v874 = vpop.f32.mrf.mxu0
        %v875 = vadd.f32 %v826, %v874
        %v876 = vpop.f32.mrf.mxu0
        %v877 = vadd.f32 %v828, %v876
        %878 = vmatmul.bf16.gmra.mxu0 %v615
        %v879 = vpop.f32.mrf.mxu0
        %v880 = vadd.f32 %v831, %v879
        %v881 = vpop.f32.mrf.mxu0
        %v882 = vadd.f32 %v833, %v881
        %883 = vmatmul.bf16.gmra.mxu0 %v617
        %v884 = vpop.f32.mrf.mxu0
        %v885 = vadd.f32 %v836, %v884
        %v886 = vpop.f32.mrf.mxu0
        %v887 = vadd.f32 %v838, %v886
        %888 = vmatmul.bf16.gmra.mxu0 %v619
        %v889 = vpop.f32.mrf.mxu0
        %v890 = vadd.f32 %v841, %v889
        %v891 = vpop.f32.mrf.mxu0
        %v892 = vadd.f32 %v843, %v891
        %893 = vdwg.mxu0
        %894 = vmatpush.bf16.msra.mxu0 %v747
        %895 = vmatpush.bf16.msra.mxu0 %v745
        %896 = vmatpush.bf16.msra.mxu0 %v743
        %897 = vmatpush.bf16.msra.mxu0 %v741
        %898 = vmatpush.bf16.msra.mxu0 %v739
        %899 = vmatpush.bf16.msra.mxu0 %v737
        %900 = vmatpush.bf16.msra.mxu0 %v735
        %901 = vmatpush.bf16.msra.mxu0 %v733
        %902 = vmatmul.bf16.gmra.mxu0 %v604
        %v903 = vpop.f32.mrf.mxu0
        %v904 = vadd.f32 %v553, %v903
        %v905 = vpop.f32.mrf.mxu0
        %v906 = vadd.f32 %v553, %v905
        %907 = vmatmul.bf16.gmra.mxu0 %v606
        %v908 = vpop.f32.mrf.mxu0
        %v909 = vadd.f32 %v553, %v908
        %v910 = vpop.f32.mrf.mxu0
        %v911 = vadd.f32 %v553, %v910
        %912 = vmatmul.bf16.gmra.mxu0 %v608
        %v913 = vpop.f32.mrf.mxu0
        %v914 = vadd.f32 %v553, %v913
        %v915 = vpop.f32.mrf.mxu0
        %v916 = vadd.f32 %v553, %v915
        %917 = vmatmul.bf16.gmra.mxu0 %v610
        %v918 = vpop.f32.mrf.mxu0
        %v919 = vadd.f32 %v553, %v918
        %v920 = vpop.f32.mrf.mxu0
        %v921 = vadd.f32 %v553, %v920
        %922 = vmatmul.bf16.gmra.mxu0 %v612
        %v923 = vpop.f32.mrf.mxu0
        %v924 = vadd.f32 %v553, %v923
        %v925 = vpop.f32.mrf.mxu0
        %v926 = vadd.f32 %v553, %v925
        %927 = vmatmul.bf16.gmra.mxu0 %v614
        %v928 = vpop.f32.mrf.mxu0
        %v929 = vadd.f32 %v553, %v928
        %v930 = vpop.f32.mrf.mxu0
        %v931 = vadd.f32 %v553, %v930
        %932 = vmatmul.bf16.gmra.mxu0 %v616
        %v933 = vpop.f32.mrf.mxu0
        %v934 = vadd.f32 %v553, %v933
        %v935 = vpop.f32.mrf.mxu0
        %v936 = vadd.f32 %v553, %v935
        %937 = vmatmul.bf16.gmra.mxu0 %v618
        %v938 = vpop.f32.mrf.mxu0
        %v939 = vadd.f32 %v553, %v938
        %v940 = vpop.f32.mrf.mxu0
        %v941 = vadd.f32 %v553, %v940
        %942 = vdwg.mxu0
        %943 = vmatpush.bf16.msra.mxu0 %v763
        %944 = vmatpush.bf16.msra.mxu0 %v761
        %945 = vmatpush.bf16.msra.mxu0 %v759
        %946 = vmatpush.bf16.msra.mxu0 %v757
        %947 = vmatpush.bf16.msra.mxu0 %v755
        %948 = vmatpush.bf16.msra.mxu0 %v753
        %949 = vmatpush.bf16.msra.mxu0 %v751
        %950 = vmatpush.bf16.msra.mxu0 %v749
        %951 = vmatmul.bf16.gmra.mxu0 %v605
        %v952 = vpop.f32.mrf.mxu0
        %v953 = vadd.f32 %v904, %v952
        %v954 = vpop.f32.mrf.mxu0
        %v955 = vadd.f32 %v906, %v954
        %956 = vmatmul.bf16.gmra.mxu0 %v607
        %v957 = vpop.f32.mrf.mxu0
        %v958 = vadd.f32 %v909, %v957
        %v959 = vpop.f32.mrf.mxu0
        %v960 = vadd.f32 %v911, %v959
        %961 = vmatmul.bf16.gmra.mxu0 %v609
        %v962 = vpop.f32.mrf.mxu0
        %v963 = vadd.f32 %v914, %v962
        %v964 = vpop.f32.mrf.mxu0
        %v965 = vadd.f32 %v916, %v964
        %966 = vmatmul.bf16.gmra.mxu0 %v611
        %v967 = vpop.f32.mrf.mxu0
        %v968 = vadd.f32 %v919, %v967
        %v969 = vpop.f32.mrf.mxu0
        %v970 = vadd.f32 %v921, %v969
        %971 = vmatmul.bf16.gmra.mxu0 %v613
        %v972 = vpop.f32.mrf.mxu0
        %v973 = vadd.f32 %v924, %v972
        %v974 = vpop.f32.mrf.mxu0
        %v975 = vadd.f32 %v926, %v974
        %976 = vmatmul.bf16.gmra.mxu0 %v615
        %v977 = vpop.f32.mrf.mxu0
        %v978 = vadd.f32 %v929, %v977
        %v979 = vpop.f32.mrf.mxu0
        %v980 = vadd.f32 %v931, %v979
        %981 = vmatmul.bf16.gmra.mxu0 %v617
        %v982 = vpop.f32.mrf.mxu0
        %v983 = vadd.f32 %v934, %v982
        %v984 = vpop.f32.mrf.mxu0
        %v985 = vadd.f32 %v936, %v984
        %986 = vmatmul.bf16.gmra.mxu0 %v619
        %v987 = vpop.f32.mrf.mxu0
        %v988 = vadd.f32 %v939, %v987
        %v989 = vpop.f32.mrf.mxu0
        %v990 = vadd.f32 %v941, %v989
        %991 = vdwg.mxu0
        %v992 = vmax.f32 %v855, 0.0
        %v993 = vmax.f32 %v953, 0.0
        %v994 = vmax.f32 %v857, 0.0
        %v995 = vmax.f32 %v955, 0.0
        %v996 = vmax.f32 %v860, 0.0
        %v997 = vmax.f32 %v958, 0.0
        %v998 = vmax.f32 %v862, 0.0
        %v999 = vmax.f32 %v960, 0.0
        %v1000 = vmax.f32 %v865, 0.0
        %v1001 = vmax.f32 %v963, 0.0
        %v1002 = vmax.f32 %v867, 0.0
        %v1003 = vmax.f32 %v965, 0.0
        %v1004 = vmax.f32 %v870, 0.0
        %v1005 = vmax.f32 %v968, 0.0
        %v1006 = vmax.f32 %v872, 0.0
        %v1007 = vmax.f32 %v970, 0.0
        %v1008 = vmax.f32 %v875, 0.0
        %v1009 = vmax.f32 %v973, 0.0
        %v1010 = vmax.f32 %v877, 0.0
        %v1011 = vmax.f32 %v975, 0.0
        %v1012 = vmax.f32 %v880, 0.0
        %v1013 = vmax.f32 %v978, 0.0
        %v1014 = vmax.f32 %v882, 0.0
        %v1015 = vmax.f32 %v980, 0.0
        %v1016 = vmax.f32 %v885, 0.0
        %v1017 = vmax.f32 %v983, 0.0
        %v1018 = vmax.f32 %v887, 0.0
        %v1019 = vmax.f32 %v985, 0.0
        %v1020 = vmax.f32 %v890, 0.0
        %v1021 = vmax.f32 %v988, 0.0
        %v1022 = vmax.f32 %v892, 0.0
        %v1023 = vmax.f32 %v990, 0.0
        %v1024 = vsel %vm486, 1, 0
        %v1025 = vsel %vm487, 1, 0
        %v1026 = vsel %vm488, 1, 0
        %v1027 = vsel %vm489, 1, 0
        %v1028 = vsel %vm490, 1, 0
        %v1029 = vsel %vm491, 1, 0
        %v1030 = vsel %vm492, 1, 0
        %v1031 = vsel %vm493, 1, 0
        %v1032 = vsel %vm494, 1, 0
        %v1033 = vsel %vm495, 1, 0
        %v1034 = vsel %vm496, 1, 0
        %v1035 = vsel %vm497, 1, 0
        %v1036 = vsel %vm498, 1, 0
        %v1037 = vsel %vm499, 1, 0
        %v1038 = vsel %vm500, 1, 0
        %v1039 = vsel %vm501, 1, 0
        %vm1040 = vcmp.eq.s32.totalorder %v1024, 1
        %vm1041 = vcmp.eq.s32.totalorder %v1025, 1
        %vm1042 = vcmp.eq.s32.totalorder %v1026, 1
        %vm1043 = vcmp.eq.s32.totalorder %v1027, 1
        %vm1044 = vcmp.eq.s32.totalorder %v1028, 1
        %vm1045 = vcmp.eq.s32.totalorder %v1029, 1
        %vm1046 = vcmp.eq.s32.totalorder %v1030, 1
        %vm1047 = vcmp.eq.s32.totalorder %v1031, 1
        %vm1048 = vcmp.eq.s32.totalorder %v1032, 1
        %vm1049 = vcmp.eq.s32.totalorder %v1033, 1
        %vm1050 = vcmp.eq.s32.totalorder %v1034, 1
        %vm1051 = vcmp.eq.s32.totalorder %v1035, 1
        %vm1052 = vcmp.eq.s32.totalorder %v1036, 1
        %vm1053 = vcmp.eq.s32.totalorder %v1037, 1
        %vm1054 = vcmp.eq.s32.totalorder %v1038, 1
        %vm1055 = vcmp.eq.s32.totalorder %v1039, 1
        %v1056 = vsel %vm1040, %v992, 0.0
        %v1057 = vsel %vm1040, %v993, 0.0
        %v1058 = vsel %vm1041, %v994, 0.0
        %v1059 = vsel %vm1041, %v995, 0.0
        %v1060 = vsel %vm1042, %v996, 0.0
        %v1061 = vsel %vm1042, %v997, 0.0
        %v1062 = vsel %vm1043, %v998, 0.0
        %v1063 = vsel %vm1043, %v999, 0.0
        %v1064 = vsel %vm1044, %v1000, 0.0
        %v1065 = vsel %vm1044, %v1001, 0.0
        %v1066 = vsel %vm1045, %v1002, 0.0
        %v1067 = vsel %vm1045, %v1003, 0.0
        %v1068 = vsel %vm1046, %v1004, 0.0
        %v1069 = vsel %vm1046, %v1005, 0.0
        %v1070 = vsel %vm1047, %v1006, 0.0
        %v1071 = vsel %vm1047, %v1007, 0.0
        %v1072 = vsel %vm1048, %v1008, 0.0
        %v1073 = vsel %vm1048, %v1009, 0.0
        %v1074 = vsel %vm1049, %v1010, 0.0
        %v1075 = vsel %vm1049, %v1011, 0.0
        %v1076 = vsel %vm1050, %v1012, 0.0
        %v1077 = vsel %vm1050, %v1013, 0.0
        %v1078 = vsel %vm1051, %v1014, 0.0
        %v1079 = vsel %vm1051, %v1015, 0.0
        %v1080 = vsel %vm1052, %v1016, 0.0
        %v1081 = vsel %vm1052, %v1017, 0.0
        %v1082 = vsel %vm1053, %v1018, 0.0
        %v1083 = vsel %vm1053, %v1019, 0.0
        %v1084 = vsel %vm1054, %v1020, 0.0
        %v1085 = vsel %vm1054, %v1021, 0.0
        %v1086 = vsel %vm1055, %v1022, 0.0
        %v1087 = vsel %vm1055, %v1023, 0.0
        %v1088 = vpack.c.bf16 %v1058, %v1056
        %v1089 = vpack.c.bf16 %v1059, %v1057
        %v1090 = vpack.c.bf16 %v1062, %v1060
        %v1091 = vpack.c.bf16 %v1063, %v1061
        %v1092 = vpack.c.bf16 %v1066, %v1064
        %v1093 = vpack.c.bf16 %v1067, %v1065
        %v1094 = vpack.c.bf16 %v1070, %v1068
        %v1095 = vpack.c.bf16 %v1071, %v1069
        %v1096 = vpack.c.bf16 %v1074, %v1072
        %v1097 = vpack.c.bf16 %v1075, %v1073
        %v1098 = vpack.c.bf16 %v1078, %v1076
        %v1099 = vpack.c.bf16 %v1079, %v1077
        %v1100 = vpack.c.bf16 %v1082, %v1080
        %v1101 = vpack.c.bf16 %v1083, %v1081
        %v1102 = vpack.c.bf16 %v1086, %v1084
        %v1103 = vpack.c.bf16 %v1087, %v1085
        %v1104 = vld [vmem:[%s3] sm:$0xff]
        %v1105 = vld [vmem:[%s3 + $0x8] sm:$0xff]
        %v1106 = vld [vmem:[%s3 + $0x10] sm:$0xff]
        %v1107 = vld [vmem:[%s3 + $0x18] sm:$0xff]
        %v1108 = vld [vmem:[%s3 + $0x20] sm:$0xff]
        %v1109 = vld [vmem:[%s3 + $0x28] sm:$0xff]
        %v1110 = vld [vmem:[%s3 + $0x30] sm:$0xff]
        %v1111 = vld [vmem:[%s3 + $0x38] sm:$0xff]
        %v1112 = vld [vmem:[%s3 + $0x40] sm:$0xff]
        %v1113 = vld [vmem:[%s3 + $0x48] sm:$0xff]
        %v1114 = vld [vmem:[%s3 + $0x50] sm:$0xff]
        %v1115 = vld [vmem:[%s3 + $0x58] sm:$0xff]
        %v1116 = vld [vmem:[%s3 + $0x60] sm:$0xff]
        %v1117 = vld [vmem:[%s3 + $0x68] sm:$0xff]
        %v1118 = vld [vmem:[%s3 + $0x70] sm:$0xff]
        %v1119 = vld [vmem:[%s3 + $0x78] sm:$0xff]
        %v1120 = vld [vmem:[%s3 + $0x80] sm:$0xff]
        %v1121 = vld [vmem:[%s3 + $0x88] sm:$0xff]
        %v1122 = vld [vmem:[%s3 + $0x90] sm:$0xff]
        %v1123 = vld [vmem:[%s3 + $0x98] sm:$0xff]
        %v1124 = vld [vmem:[%s3 + $0xa0] sm:$0xff]
        %v1125 = vld [vmem:[%s3 + $0xa8] sm:$0xff]
        %v1126 = vld [vmem:[%s3 + $0xb0] sm:$0xff]
        %v1127 = vld [vmem:[%s3 + $0xb8] sm:$0xff]
        %v1128 = vld [vmem:[%s3 + $0xc0] sm:$0xff]
        %v1129 = vld [vmem:[%s3 + $0xc8] sm:$0xff]
        %v1130 = vld [vmem:[%s3 + $0xd0] sm:$0xff]
        %v1131 = vld [vmem:[%s3 + $0xd8] sm:$0xff]
        %v1132 = vld [vmem:[%s3 + $0xe0] sm:$0xff]
        %v1133 = vld [vmem:[%s3 + $0xe8] sm:$0xff]
        %v1134 = vld [vmem:[%s3 + $0xf0] sm:$0xff]
        %v1135 = vld [vmem:[%s3 + $0xf8] sm:$0xff]
        %v1136 = vld [vmem:[%s4] sm:$0x3]
        %v1138 = vperm.slane %v1136, 0
        %v1139 = vperm.slane %v1136, 1
        %v1174 = vunpack.c.l.b16 %v1104
        %v1175 = vunpack.c.h.b16 %v1104
        %v1176 = vunpack.c.l.b16 %v1105
        %v1177 = vunpack.c.h.b16 %v1105
        %v1178 = vunpack.c.l.b16 %v1106
        %v1179 = vunpack.c.h.b16 %v1106
        %v1180 = vunpack.c.l.b16 %v1107
        %v1181 = vunpack.c.h.b16 %v1107
        %v1182 = vunpack.c.l.b16 %v1108
        %v1183 = vunpack.c.h.b16 %v1108
        %v1184 = vunpack.c.l.b16 %v1109
        %v1185 = vunpack.c.h.b16 %v1109
        %v1186 = vunpack.c.l.b16 %v1110
        %v1187 = vunpack.c.h.b16 %v1110
        %v1188 = vunpack.c.l.b16 %v1111
        %v1189 = vunpack.c.h.b16 %v1111
        %v1190 = vunpack.c.l.b16 %v1112
        %v1191 = vunpack.c.h.b16 %v1112
        %v1192 = vunpack.c.l.b16 %v1113
        %v1193 = vunpack.c.h.b16 %v1113
        %v1194 = vunpack.c.l.b16 %v1114
        %v1195 = vunpack.c.h.b16 %v1114
        %v1196 = vunpack.c.l.b16 %v1115
        %v1197 = vunpack.c.h.b16 %v1115
        %v1198 = vunpack.c.l.b16 %v1116
        %v1199 = vunpack.c.h.b16 %v1116
        %v1200 = vunpack.c.l.b16 %v1117
        %v1201 = vunpack.c.h.b16 %v1117
        %v1202 = vunpack.c.l.b16 %v1118
        %v1203 = vunpack.c.h.b16 %v1118
        %v1204 = vunpack.c.l.b16 %v1119
        %v1205 = vunpack.c.h.b16 %v1119
        %v1206 = vunpack.c.l.b16 %v1120
        %v1207 = vunpack.c.h.b16 %v1120
        %v1208 = vunpack.c.l.b16 %v1121
        %v1209 = vunpack.c.h.b16 %v1121
        %v1210 = vunpack.c.l.b16 %v1122
        %v1211 = vunpack.c.h.b16 %v1122
        %v1212 = vunpack.c.l.b16 %v1123
        %v1213 = vunpack.c.h.b16 %v1123
        %v1214 = vunpack.c.l.b16 %v1124
        %v1215 = vunpack.c.h.b16 %v1124
        %v1216 = vunpack.c.l.b16 %v1125
        %v1217 = vunpack.c.h.b16 %v1125
        %v1218 = vunpack.c.l.b16 %v1126
        %v1219 = vunpack.c.h.b16 %v1126
        %v1220 = vunpack.c.l.b16 %v1127
        %v1221 = vunpack.c.h.b16 %v1127
        %v1222 = vunpack.c.l.b16 %v1128
        %v1223 = vunpack.c.h.b16 %v1128
        %v1224 = vunpack.c.l.b16 %v1129
        %v1225 = vunpack.c.h.b16 %v1129
        %v1226 = vunpack.c.l.b16 %v1130
        %v1227 = vunpack.c.h.b16 %v1130
        %v1228 = vunpack.c.l.b16 %v1131
        %v1229 = vunpack.c.h.b16 %v1131
        %v1230 = vunpack.c.l.b16 %v1132
        %v1231 = vunpack.c.h.b16 %v1132
        %v1232 = vunpack.c.l.b16 %v1133
        %v1233 = vunpack.c.h.b16 %v1133
        %v1234 = vunpack.c.l.b16 %v1134
        %v1235 = vunpack.c.h.b16 %v1134
        %v1236 = vunpack.c.l.b16 %v1135
        %v1237 = vunpack.c.h.b16 %v1135
        %v1238 = vpack.c.b16 %v1176, %v1174
        %v1239 = vpack.c.b16 %v1177, %v1175
        %v1240 = vpack.c.b16 %v1180, %v1178
        %v1241 = vpack.c.b16 %v1181, %v1179
        %v1242 = vpack.c.b16 %v1184, %v1182
        %v1243 = vpack.c.b16 %v1185, %v1183
        %v1244 = vpack.c.b16 %v1188, %v1186
        %v1245 = vpack.c.b16 %v1189, %v1187
        %v1246 = vpack.c.b16 %v1192, %v1190
        %v1247 = vpack.c.b16 %v1193, %v1191
        %v1248 = vpack.c.b16 %v1196, %v1194
        %v1249 = vpack.c.b16 %v1197, %v1195
        %v1250 = vpack.c.b16 %v1200, %v1198
        %v1251 = vpack.c.b16 %v1201, %v1199
        %v1252 = vpack.c.b16 %v1204, %v1202
        %v1253 = vpack.c.b16 %v1205, %v1203
        %v1254 = vpack.c.b16 %v1208, %v1206
        %v1255 = vpack.c.b16 %v1209, %v1207
        %v1256 = vpack.c.b16 %v1212, %v1210
        %v1257 = vpack.c.b16 %v1213, %v1211
        %v1258 = vpack.c.b16 %v1216, %v1214
        %v1259 = vpack.c.b16 %v1217, %v1215
        %v1260 = vpack.c.b16 %v1220, %v1218
        %v1261 = vpack.c.b16 %v1221, %v1219
        %v1262 = vpack.c.b16 %v1224, %v1222
        %v1263 = vpack.c.b16 %v1225, %v1223
        %v1264 = vpack.c.b16 %v1228, %v1226
        %v1265 = vpack.c.b16 %v1229, %v1227
        %v1266 = vpack.c.b16 %v1232, %v1230
        %v1267 = vpack.c.b16 %v1233, %v1231
        %v1268 = vpack.c.b16 %v1236, %v1234
        %v1269 = vpack.c.b16 %v1237, %v1235
        %1302 = vmatpush.bf16.msra.mxu0 %v1252
        %1303 = vmatpush.bf16.msra.mxu0 %v1250
        %1304 = vmatpush.bf16.msra.mxu0 %v1248
        %1305 = vmatpush.bf16.msra.mxu0 %v1246
        %1306 = vmatpush.bf16.msra.mxu0 %v1244
        %1307 = vmatpush.bf16.msra.mxu0 %v1242
        %1308 = vmatpush.bf16.msra.mxu0 %v1240
        %1309 = vmatpush.bf16.msra.mxu0 %v1238
        %1310 = vmatmul.bf16.gmra.mxu0 %v1088
        %v1311 = vpop.f32.mrf.mxu0
        %v1312 = vadd.f32 %v1138, %v1311
        %v1313 = vpop.f32.mrf.mxu0
        %v1314 = vadd.f32 %v1138, %v1313
        %1315 = vmatmul.bf16.gmra.mxu0 %v1090
        %v1316 = vpop.f32.mrf.mxu0
        %v1317 = vadd.f32 %v1138, %v1316
        %v1318 = vpop.f32.mrf.mxu0
        %v1319 = vadd.f32 %v1138, %v1318
        %1320 = vmatmul.bf16.gmra.mxu0 %v1092
        %v1321 = vpop.f32.mrf.mxu0
        %v1322 = vadd.f32 %v1138, %v1321
        %v1323 = vpop.f32.mrf.mxu0
        %v1324 = vadd.f32 %v1138, %v1323
        %1325 = vmatmul.bf16.gmra.mxu0 %v1094
        %v1326 = vpop.f32.mrf.mxu0
        %v1327 = vadd.f32 %v1138, %v1326
        %v1328 = vpop.f32.mrf.mxu0
        %v1329 = vadd.f32 %v1138, %v1328
        %1330 = vmatmul.bf16.gmra.mxu0 %v1096
        %v1331 = vpop.f32.mrf.mxu0
        %v1332 = vadd.f32 %v1138, %v1331
        %v1333 = vpop.f32.mrf.mxu0
        %v1334 = vadd.f32 %v1138, %v1333
        %1335 = vmatmul.bf16.gmra.mxu0 %v1098
        %v1336 = vpop.f32.mrf.mxu0
        %v1337 = vadd.f32 %v1138, %v1336
        %v1338 = vpop.f32.mrf.mxu0
        %v1339 = vadd.f32 %v1138, %v1338
        %1340 = vmatmul.bf16.gmra.mxu0 %v1100
        %v1341 = vpop.f32.mrf.mxu0
        %v1342 = vadd.f32 %v1138, %v1341
        %v1343 = vpop.f32.mrf.mxu0
        %v1344 = vadd.f32 %v1138, %v1343
        %1345 = vmatmul.bf16.gmra.mxu0 %v1102
        %v1346 = vpop.f32.mrf.mxu0
        %v1347 = vadd.f32 %v1138, %v1346
        %v1348 = vpop.f32.mrf.mxu0
        %v1349 = vadd.f32 %v1138, %v1348
        %1350 = vdwg.mxu0
        %1351 = vmatpush.bf16.msra.mxu0 %v1268
        %1352 = vmatpush.bf16.msra.mxu0 %v1266
        %1353 = vmatpush.bf16.msra.mxu0 %v1264
        %1354 = vmatpush.bf16.msra.mxu0 %v1262
        %1355 = vmatpush.bf16.msra.mxu0 %v1260
        %1356 = vmatpush.bf16.msra.mxu0 %v1258
        %1357 = vmatpush.bf16.msra.mxu0 %v1256
        %1358 = vmatpush.bf16.msra.mxu0 %v1254
        %1359 = vmatmul.bf16.gmra.mxu0 %v1089
        %v1360 = vpop.f32.mrf.mxu0
        %v1361 = vadd.f32 %v1312, %v1360
        %v1362 = vpop.f32.mrf.mxu0
        %v1363 = vadd.f32 %v1314, %v1362
        %1364 = vmatmul.bf16.gmra.mxu0 %v1091
        %v1365 = vpop.f32.mrf.mxu0
        %v1366 = vadd.f32 %v1317, %v1365
        %v1367 = vpop.f32.mrf.mxu0
        %v1368 = vadd.f32 %v1319, %v1367
        %1369 = vmatmul.bf16.gmra.mxu0 %v1093
        %v1370 = vpop.f32.mrf.mxu0
        %v1371 = vadd.f32 %v1322, %v1370
        %v1372 = vpop.f32.mrf.mxu0
        %v1373 = vadd.f32 %v1324, %v1372
        %1374 = vmatmul.bf16.gmra.mxu0 %v1095
        %v1375 = vpop.f32.mrf.mxu0
        %v1376 = vadd.f32 %v1327, %v1375
        %v1377 = vpop.f32.mrf.mxu0
        %v1378 = vadd.f32 %v1329, %v1377
        %1379 = vmatmul.bf16.gmra.mxu0 %v1097
        %v1380 = vpop.f32.mrf.mxu0
        %v1381 = vadd.f32 %v1332, %v1380
        %v1382 = vpop.f32.mrf.mxu0
        %v1383 = vadd.f32 %v1334, %v1382
        %1384 = vmatmul.bf16.gmra.mxu0 %v1099
        %v1385 = vpop.f32.mrf.mxu0
        %v1386 = vadd.f32 %v1337, %v1385
        %v1387 = vpop.f32.mrf.mxu0
        %v1388 = vadd.f32 %v1339, %v1387
        %1389 = vmatmul.bf16.gmra.mxu0 %v1101
        %v1390 = vpop.f32.mrf.mxu0
        %v1391 = vadd.f32 %v1342, %v1390
        %v1392 = vpop.f32.mrf.mxu0
        %v1393 = vadd.f32 %v1344, %v1392
        %1394 = vmatmul.bf16.gmra.mxu0 %v1103
        %v1395 = vpop.f32.mrf.mxu0
        %v1396 = vadd.f32 %v1347, %v1395
        %v1397 = vpop.f32.mrf.mxu0
        %v1398 = vadd.f32 %v1349, %v1397
        %1399 = vdwg.mxu0
        %1400 = vmatpush.bf16.msra.mxu0 %v1253
        %1401 = vmatpush.bf16.msra.mxu0 %v1251
        %1402 = vmatpush.bf16.msra.mxu0 %v1249
        %1403 = vmatpush.bf16.msra.mxu0 %v1247
        %1404 = vmatpush.bf16.msra.mxu0 %v1245
        %1405 = vmatpush.bf16.msra.mxu0 %v1243
        %1406 = vmatpush.bf16.msra.mxu0 %v1241
        %1407 = vmatpush.bf16.msra.mxu0 %v1239
        %1408 = vmatmul.bf16.gmra.mxu0 %v1088
        %v1409 = vpop.f32.mrf.mxu0
        %v1410 = vadd.f32 %v1139, %v1409
        %v1411 = vpop.f32.mrf.mxu0
        %v1412 = vadd.f32 %v1139, %v1411
        %1413 = vmatmul.bf16.gmra.mxu0 %v1090
        %v1414 = vpop.f32.mrf.mxu0
        %v1415 = vadd.f32 %v1139, %v1414
        %v1416 = vpop.f32.mrf.mxu0
        %v1417 = vadd.f32 %v1139, %v1416
        %1418 = vmatmul.bf16.gmra.mxu0 %v1092
        %v1419 = vpop.f32.mrf.mxu0
        %v1420 = vadd.f32 %v1139, %v1419
        %v1421 = vpop.f32.mrf.mxu0
        %v1422 = vadd.f32 %v1139, %v1421
        %1423 = vmatmul.bf16.gmra.mxu0 %v1094
        %v1424 = vpop.f32.mrf.mxu0
        %v1425 = vadd.f32 %v1139, %v1424
        %v1426 = vpop.f32.mrf.mxu0
        %v1427 = vadd.f32 %v1139, %v1426
        %1428 = vmatmul.bf16.gmra.mxu0 %v1096
        %v1429 = vpop.f32.mrf.mxu0
        %v1430 = vadd.f32 %v1139, %v1429
        %v1431 = vpop.f32.mrf.mxu0
        %v1432 = vadd.f32 %v1139, %v1431
        %1433 = vmatmul.bf16.gmra.mxu0 %v1098
        %v1434 = vpop.f32.mrf.mxu0
        %v1435 = vadd.f32 %v1139, %v1434
        %v1436 = vpop.f32.mrf.mxu0
        %v1437 = vadd.f32 %v1139, %v1436
        %1438 = vmatmul.bf16.gmra.mxu0 %v1100
        %v1439 = vpop.f32.mrf.mxu0
        %v1440 = vadd.f32 %v1139, %v1439
        %v1441 = vpop.f32.mrf.mxu0
        %v1442 = vadd.f32 %v1139, %v1441
        %1443 = vmatmul.bf16.gmra.mxu0 %v1102
        %v1444 = vpop.f32.mrf.mxu0
        %v1445 = vadd.f32 %v1139, %v1444
        %v1446 = vpop.f32.mrf.mxu0
        %v1447 = vadd.f32 %v1139, %v1446
        %1448 = vdwg.mxu0
        %1449 = vmatpush.bf16.msra.mxu0 %v1269
        %1450 = vmatpush.bf16.msra.mxu0 %v1267
        %1451 = vmatpush.bf16.msra.mxu0 %v1265
        %1452 = vmatpush.bf16.msra.mxu0 %v1263
        %1453 = vmatpush.bf16.msra.mxu0 %v1261
        %1454 = vmatpush.bf16.msra.mxu0 %v1259
        %1455 = vmatpush.bf16.msra.mxu0 %v1257
        %1456 = vmatpush.bf16.msra.mxu0 %v1255
        %1457 = vmatmul.bf16.gmra.mxu0 %v1089
        %v1458 = vpop.f32.mrf.mxu0
        %v1459 = vadd.f32 %v1410, %v1458
        %v1460 = vpop.f32.mrf.mxu0
        %v1461 = vadd.f32 %v1412, %v1460
        %1462 = vmatmul.bf16.gmra.mxu0 %v1091
        %v1463 = vpop.f32.mrf.mxu0
        %v1464 = vadd.f32 %v1415, %v1463
        %v1465 = vpop.f32.mrf.mxu0
        %v1466 = vadd.f32 %v1417, %v1465
        %1467 = vmatmul.bf16.gmra.mxu0 %v1093
        %v1468 = vpop.f32.mrf.mxu0
        %v1469 = vadd.f32 %v1420, %v1468
        %v1470 = vpop.f32.mrf.mxu0
        %v1471 = vadd.f32 %v1422, %v1470
        %1472 = vmatmul.bf16.gmra.mxu0 %v1095
        %v1473 = vpop.f32.mrf.mxu0
        %v1474 = vadd.f32 %v1425, %v1473
        %v1475 = vpop.f32.mrf.mxu0
        %v1476 = vadd.f32 %v1427, %v1475
        %1477 = vmatmul.bf16.gmra.mxu0 %v1097
        %v1478 = vpop.f32.mrf.mxu0
        %v1479 = vadd.f32 %v1430, %v1478
        %v1480 = vpop.f32.mrf.mxu0
        %v1481 = vadd.f32 %v1432, %v1480
        %1482 = vmatmul.bf16.gmra.mxu0 %v1099
        %v1483 = vpop.f32.mrf.mxu0
        %v1484 = vadd.f32 %v1435, %v1483
        %v1485 = vpop.f32.mrf.mxu0
        %v1486 = vadd.f32 %v1437, %v1485
        %1487 = vmatmul.bf16.gmra.mxu0 %v1101
        %v1488 = vpop.f32.mrf.mxu0
        %v1489 = vadd.f32 %v1440, %v1488
        %v1490 = vpop.f32.mrf.mxu0
        %v1491 = vadd.f32 %v1442, %v1490
        %1492 = vmatmul.bf16.gmra.mxu0 %v1103
        %v1493 = vpop.f32.mrf.mxu0
        %v1494 = vadd.f32 %v1445, %v1493
        %v1495 = vpop.f32.mrf.mxu0
        %v1496 = vadd.f32 %v1447, %v1495
        %1497 = vdwg.mxu0
        %v1498 = vtanh.pop %v1361
        %v1499 = vtanh.pop %v1363
        %v1500 = vtanh.pop %v1366
        %v1501 = vtanh.pop %v1368
        %v1502 = vtanh.pop %v1371
        %v1503 = vtanh.pop %v1373
        %v1504 = vtanh.pop %v1376
        %v1505 = vtanh.pop %v1378
        %v1506 = vtanh.pop %v1381
        %v1507 = vtanh.pop %v1383
        %v1508 = vtanh.pop %v1386
        %v1509 = vtanh.pop %v1388
        %v1510 = vtanh.pop %v1391
        %v1511 = vtanh.pop %v1393
        %v1512 = vtanh.pop %v1396
        %v1513 = vtanh.pop %v1398
        %v1514 = vxor.u32 %v1459, 2147483648
        %v1515 = vxor.u32 %v1461, 2147483648
        %v1516 = vxor.u32 %v1464, 2147483648
        %v1517 = vxor.u32 %v1466, 2147483648
        %v1518 = vxor.u32 %v1469, 2147483648
        %v1519 = vxor.u32 %v1471, 2147483648
        %v1520 = vxor.u32 %v1474, 2147483648
        %v1521 = vxor.u32 %v1476, 2147483648
        %v1522 = vxor.u32 %v1479, 2147483648
        %v1523 = vxor.u32 %v1481, 2147483648
        %v1524 = vxor.u32 %v1484, 2147483648
        %v1525 = vxor.u32 %v1486, 2147483648
        %v1526 = vxor.u32 %v1489, 2147483648
        %v1527 = vxor.u32 %v1491, 2147483648
        %v1528 = vxor.u32 %v1494, 2147483648
        %v1529 = vxor.u32 %v1496, 2147483648
        %v1530 = vmul.f32 %v1514, 1.442695
        %v1531 = vpow.pop %v1530
        %v1532 = vmul.f32 %v1515, 1.442695
        %v1533 = vpow.pop %v1532
        %v1534 = vmul.f32 %v1516, 1.442695
        %v1535 = vpow.pop %v1534
        %v1536 = vmul.f32 %v1517, 1.442695
        %v1537 = vpow.pop %v1536
        %v1538 = vmul.f32 %v1518, 1.442695
        %v1539 = vpow.pop %v1538
        %v1540 = vmul.f32 %v1519, 1.442695
        %v1541 = vpow.pop %v1540
        %v1542 = vmul.f32 %v1520, 1.442695
        %v1543 = vpow.pop %v1542
        %v1544 = vmul.f32 %v1521, 1.442695
        %v1545 = vpow.pop %v1544
        %v1546 = vmul.f32 %v1522, 1.442695
        %v1547 = vpow.pop %v1546
        %v1548 = vmul.f32 %v1523, 1.442695
        %v1549 = vpow.pop %v1548
        %v1550 = vmul.f32 %v1524, 1.442695
        %v1551 = vpow.pop %v1550
        %v1552 = vmul.f32 %v1525, 1.442695
        %v1553 = vpow.pop %v1552
        %v1554 = vmul.f32 %v1526, 1.442695
        %v1555 = vpow.pop %v1554
        %v1556 = vmul.f32 %v1527, 1.442695
        %v1557 = vpow.pop %v1556
        %v1558 = vmul.f32 %v1528, 1.442695
        %v1559 = vpow.pop %v1558
        %v1560 = vmul.f32 %v1529, 1.442695
        %v1561 = vpow.pop %v1560
        %v1562 = vadd.f32 %v1531, 1.0
        %v1563 = vadd.f32 %v1533, 1.0
        %v1564 = vadd.f32 %v1535, 1.0
        %v1565 = vadd.f32 %v1537, 1.0
        %v1566 = vadd.f32 %v1539, 1.0
        %v1567 = vadd.f32 %v1541, 1.0
        %v1568 = vadd.f32 %v1543, 1.0
        %v1569 = vadd.f32 %v1545, 1.0
        %v1570 = vadd.f32 %v1547, 1.0
        %v1571 = vadd.f32 %v1549, 1.0
        %v1572 = vadd.f32 %v1551, 1.0
        %v1573 = vadd.f32 %v1553, 1.0
        %v1574 = vadd.f32 %v1555, 1.0
        %v1575 = vadd.f32 %v1557, 1.0
        %v1576 = vadd.f32 %v1559, 1.0
        %v1577 = vadd.f32 %v1561, 1.0
        %v1578 = vrcp.pop %v1562
        %v1579 = vmul.f32 %v1562, %v1578
        %v1580 = vsub.f32 1.0, %v1579
        %v1581 = vmul.f32 %v1578, %v1580
        %v1582 = vadd.f32 %v1578, %v1581
        %vm1583 = vweird.f32 %v1562
        %vm1584 = vweird.f32 %v1578
        %vm1585 = vmor %vm1583, %vm1584
        %v1586 = vsel %vm1585, %v1578, %v1582
        %v1587 = vand.u32 2147483647, %v1562
        %vm1588 = vcmp.eq.f32.partialorder %v1587, 8.507059e+37
        %v1589 = vand.u32 %v1562, 2147483648
        %v1590 = vor.u32 1.1754944e-38, %v1589
        %v1591 = vsel %vm1588, %v1590, %v1586
        %v1592 = vmul.f32 1.0, %v1591
        %v1593 = vrcp.pop %v1563
        %v1594 = vmul.f32 %v1563, %v1593
        %v1595 = vsub.f32 1.0, %v1594
        %v1596 = vmul.f32 %v1593, %v1595
        %v1597 = vadd.f32 %v1593, %v1596
        %vm1598 = vweird.f32 %v1563
        %vm1599 = vweird.f32 %v1593
        %vm1600 = vmor %vm1598, %vm1599
        %v1601 = vsel %vm1600, %v1593, %v1597
        %v1602 = vand.u32 2147483647, %v1563
        %vm1603 = vcmp.eq.f32.partialorder %v1602, 8.507059e+37
        %v1604 = vand.u32 %v1563, 2147483648
        %v1605 = vor.u32 1.1754944e-38, %v1604
        %v1606 = vsel %vm1603, %v1605, %v1601
        %v1607 = vmul.f32 1.0, %v1606
        %v1608 = vrcp.pop %v1564
        %v1609 = vmul.f32 %v1564, %v1608
        %v1610 = vsub.f32 1.0, %v1609
        %v1611 = vmul.f32 %v1608, %v1610
        %v1612 = vadd.f32 %v1608, %v1611
        %vm1613 = vweird.f32 %v1564
        %vm1614 = vweird.f32 %v1608
        %vm1615 = vmor %vm1613, %vm1614
        %v1616 = vsel %vm1615, %v1608, %v1612
        %v1617 = vand.u32 2147483647, %v1564
        %vm1618 = vcmp.eq.f32.partialorder %v1617, 8.507059e+37
        %v1619 = vand.u32 %v1564, 2147483648
        %v1620 = vor.u32 1.1754944e-38, %v1619
        %v1621 = vsel %vm1618, %v1620, %v1616
        %v1622 = vmul.f32 1.0, %v1621
        %v1623 = vrcp.pop %v1565
        %v1624 = vmul.f32 %v1565, %v1623
        %v1625 = vsub.f32 1.0, %v1624
        %v1626 = vmul.f32 %v1623, %v1625
        %v1627 = vadd.f32 %v1623, %v1626
        %vm1628 = vweird.f32 %v1565
        %vm1629 = vweird.f32 %v1623
        %vm1630 = vmor %vm1628, %vm1629
        %v1631 = vsel %vm1630, %v1623, %v1627
        %v1632 = vand.u32 2147483647, %v1565
        %vm1633 = vcmp.eq.f32.partialorder %v1632, 8.507059e+37
        %v1634 = vand.u32 %v1565, 2147483648
        %v1635 = vor.u32 1.1754944e-38, %v1634
        %v1636 = vsel %vm1633, %v1635, %v1631
        %v1637 = vmul.f32 1.0, %v1636
        %v1638 = vrcp.pop %v1566
        %v1639 = vmul.f32 %v1566, %v1638
        %v1640 = vsub.f32 1.0, %v1639
        %v1641 = vmul.f32 %v1638, %v1640
        %v1642 = vadd.f32 %v1638, %v1641
        %vm1643 = vweird.f32 %v1566
        %vm1644 = vweird.f32 %v1638
        %vm1645 = vmor %vm1643, %vm1644
        %v1646 = vsel %vm1645, %v1638, %v1642
        %v1647 = vand.u32 2147483647, %v1566
        %vm1648 = vcmp.eq.f32.partialorder %v1647, 8.507059e+37
        %v1649 = vand.u32 %v1566, 2147483648
        %v1650 = vor.u32 1.1754944e-38, %v1649
        %v1651 = vsel %vm1648, %v1650, %v1646
        %v1652 = vmul.f32 1.0, %v1651
        %v1653 = vrcp.pop %v1567
        %v1654 = vmul.f32 %v1567, %v1653
        %v1655 = vsub.f32 1.0, %v1654
        %v1656 = vmul.f32 %v1653, %v1655
        %v1657 = vadd.f32 %v1653, %v1656
        %vm1658 = vweird.f32 %v1567
        %vm1659 = vweird.f32 %v1653
        %vm1660 = vmor %vm1658, %vm1659
        %v1661 = vsel %vm1660, %v1653, %v1657
        %v1662 = vand.u32 2147483647, %v1567
        %vm1663 = vcmp.eq.f32.partialorder %v1662, 8.507059e+37
        %v1664 = vand.u32 %v1567, 2147483648
        %v1665 = vor.u32 1.1754944e-38, %v1664
        %v1666 = vsel %vm1663, %v1665, %v1661
        %v1667 = vmul.f32 1.0, %v1666
        %v1668 = vrcp.pop %v1568
        %v1669 = vmul.f32 %v1568, %v1668
        %v1670 = vsub.f32 1.0, %v1669
        %v1671 = vmul.f32 %v1668, %v1670
        %v1672 = vadd.f32 %v1668, %v1671
        %vm1673 = vweird.f32 %v1568
        %vm1674 = vweird.f32 %v1668
        %vm1675 = vmor %vm1673, %vm1674
        %v1676 = vsel %vm1675, %v1668, %v1672
        %v1677 = vand.u32 2147483647, %v1568
        %vm1678 = vcmp.eq.f32.partialorder %v1677, 8.507059e+37
        %v1679 = vand.u32 %v1568, 2147483648
        %v1680 = vor.u32 1.1754944e-38, %v1679
        %v1681 = vsel %vm1678, %v1680, %v1676
        %v1682 = vmul.f32 1.0, %v1681
        %v1683 = vrcp.pop %v1569
        %v1684 = vmul.f32 %v1569, %v1683
        %v1685 = vsub.f32 1.0, %v1684
        %v1686 = vmul.f32 %v1683, %v1685
        %v1687 = vadd.f32 %v1683, %v1686
        %vm1688 = vweird.f32 %v1569
        %vm1689 = vweird.f32 %v1683
        %vm1690 = vmor %vm1688, %vm1689
        %v1691 = vsel %vm1690, %v1683, %v1687
        %v1692 = vand.u32 2147483647, %v1569
        %vm1693 = vcmp.eq.f32.partialorder %v1692, 8.507059e+37
        %v1694 = vand.u32 %v1569, 2147483648
        %v1695 = vor.u32 1.1754944e-38, %v1694
        %v1696 = vsel %vm1693, %v1695, %v1691
        %v1697 = vmul.f32 1.0, %v1696
        %v1698 = vrcp.pop %v1570
        %v1699 = vmul.f32 %v1570, %v1698
        %v1700 = vsub.f32 1.0, %v1699
        %v1701 = vmul.f32 %v1698, %v1700
        %v1702 = vadd.f32 %v1698, %v1701
        %vm1703 = vweird.f32 %v1570
        %vm1704 = vweird.f32 %v1698
        %vm1705 = vmor %vm1703, %vm1704
        %v1706 = vsel %vm1705, %v1698, %v1702
        %v1707 = vand.u32 2147483647, %v1570
        %vm1708 = vcmp.eq.f32.partialorder %v1707, 8.507059e+37
        %v1709 = vand.u32 %v1570, 2147483648
        %v1710 = vor.u32 1.1754944e-38, %v1709
        %v1711 = vsel %vm1708, %v1710, %v1706
        %v1712 = vmul.f32 1.0, %v1711
        %v1713 = vrcp.pop %v1571
        %v1714 = vmul.f32 %v1571, %v1713
        %v1715 = vsub.f32 1.0, %v1714
        %v1716 = vmul.f32 %v1713, %v1715
        %v1717 = vadd.f32 %v1713, %v1716
        %vm1718 = vweird.f32 %v1571
        %vm1719 = vweird.f32 %v1713
        %vm1720 = vmor %vm1718, %vm1719
        %v1721 = vsel %vm1720, %v1713, %v1717
        %v1722 = vand.u32 2147483647, %v1571
        %vm1723 = vcmp.eq.f32.partialorder %v1722, 8.507059e+37
        %v1724 = vand.u32 %v1571, 2147483648
        %v1725 = vor.u32 1.1754944e-38, %v1724
        %v1726 = vsel %vm1723, %v1725, %v1721
        %v1727 = vmul.f32 1.0, %v1726
        %v1728 = vrcp.pop %v1572
        %v1729 = vmul.f32 %v1572, %v1728
        %v1730 = vsub.f32 1.0, %v1729
        %v1731 = vmul.f32 %v1728, %v1730
        %v1732 = vadd.f32 %v1728, %v1731
        %vm1733 = vweird.f32 %v1572
        %vm1734 = vweird.f32 %v1728
        %vm1735 = vmor %vm1733, %vm1734
        %v1736 = vsel %vm1735, %v1728, %v1732
        %v1737 = vand.u32 2147483647, %v1572
        %vm1738 = vcmp.eq.f32.partialorder %v1737, 8.507059e+37
        %v1739 = vand.u32 %v1572, 2147483648
        %v1740 = vor.u32 1.1754944e-38, %v1739
        %v1741 = vsel %vm1738, %v1740, %v1736
        %v1742 = vmul.f32 1.0, %v1741
        %v1743 = vrcp.pop %v1573
        %v1744 = vmul.f32 %v1573, %v1743
        %v1745 = vsub.f32 1.0, %v1744
        %v1746 = vmul.f32 %v1743, %v1745
        %v1747 = vadd.f32 %v1743, %v1746
        %vm1748 = vweird.f32 %v1573
        %vm1749 = vweird.f32 %v1743
        %vm1750 = vmor %vm1748, %vm1749
        %v1751 = vsel %vm1750, %v1743, %v1747
        %v1752 = vand.u32 2147483647, %v1573
        %vm1753 = vcmp.eq.f32.partialorder %v1752, 8.507059e+37
        %v1754 = vand.u32 %v1573, 2147483648
        %v1755 = vor.u32 1.1754944e-38, %v1754
        %v1756 = vsel %vm1753, %v1755, %v1751
        %v1757 = vmul.f32 1.0, %v1756
        %v1758 = vrcp.pop %v1574
        %v1759 = vmul.f32 %v1574, %v1758
        %v1760 = vsub.f32 1.0, %v1759
        %v1761 = vmul.f32 %v1758, %v1760
        %v1762 = vadd.f32 %v1758, %v1761
        %vm1763 = vweird.f32 %v1574
        %vm1764 = vweird.f32 %v1758
        %vm1765 = vmor %vm1763, %vm1764
        %v1766 = vsel %vm1765, %v1758, %v1762
        %v1767 = vand.u32 2147483647, %v1574
        %vm1768 = vcmp.eq.f32.partialorder %v1767, 8.507059e+37
        %v1769 = vand.u32 %v1574, 2147483648
        %v1770 = vor.u32 1.1754944e-38, %v1769
        %v1771 = vsel %vm1768, %v1770, %v1766
        %v1772 = vmul.f32 1.0, %v1771
        %v1773 = vrcp.pop %v1575
        %v1774 = vmul.f32 %v1575, %v1773
        %v1775 = vsub.f32 1.0, %v1774
        %v1776 = vmul.f32 %v1773, %v1775
        %v1777 = vadd.f32 %v1773, %v1776
        %vm1778 = vweird.f32 %v1575
        %vm1779 = vweird.f32 %v1773
        %vm1780 = vmor %vm1778, %vm1779
        %v1781 = vsel %vm1780, %v1773, %v1777
        %v1782 = vand.u32 2147483647, %v1575
        %vm1783 = vcmp.eq.f32.partialorder %v1782, 8.507059e+37
        %v1784 = vand.u32 %v1575, 2147483648
        %v1785 = vor.u32 1.1754944e-38, %v1784
        %v1786 = vsel %vm1783, %v1785, %v1781
        %v1787 = vmul.f32 1.0, %v1786
        %v1788 = vrcp.pop %v1576
        %v1789 = vmul.f32 %v1576, %v1788
        %v1790 = vsub.f32 1.0, %v1789
        %v1791 = vmul.f32 %v1788, %v1790
        %v1792 = vadd.f32 %v1788, %v1791
        %vm1793 = vweird.f32 %v1576
        %vm1794 = vweird.f32 %v1788
        %vm1795 = vmor %vm1793, %vm1794
        %v1796 = vsel %vm1795, %v1788, %v1792
        %v1797 = vand.u32 2147483647, %v1576
        %vm1798 = vcmp.eq.f32.partialorder %v1797, 8.507059e+37
        %v1799 = vand.u32 %v1576, 2147483648
        %v1800 = vor.u32 1.1754944e-38, %v1799
        %v1801 = vsel %vm1798, %v1800, %v1796
        %v1802 = vmul.f32 1.0, %v1801
        %v1803 = vrcp.pop %v1577
        %v1804 = vmul.f32 %v1577, %v1803
        %v1805 = vsub.f32 1.0, %v1804
        %v1806 = vmul.f32 %v1803, %v1805
        %v1807 = vadd.f32 %v1803, %v1806
        %vm1808 = vweird.f32 %v1577
        %vm1809 = vweird.f32 %v1803
        %vm1810 = vmor %vm1808, %vm1809
        %v1811 = vsel %vm1810, %v1803, %v1807
        %v1812 = vand.u32 2147483647, %v1577
        %vm1813 = vcmp.eq.f32.partialorder %v1812, 8.507059e+37
        %v1814 = vand.u32 %v1577, 2147483648
        %v1815 = vor.u32 1.1754944e-38, %v1814
        %v1816 = vsel %vm1813, %v1815, %v1811
        %v1817 = vmul.f32 1.0, %v1816
        %v1818 = vmul.f32 %v1498, %v1592
        %v1819 = vmul.f32 %v1499, %v1607
        %v1820 = vmul.f32 %v1500, %v1622
        %v1821 = vmul.f32 %v1501, %v1637
        %v1822 = vmul.f32 %v1502, %v1652
        %v1823 = vmul.f32 %v1503, %v1667
        %v1824 = vmul.f32 %v1504, %v1682
        %v1825 = vmul.f32 %v1505, %v1697
        %v1826 = vmul.f32 %v1506, %v1712
        %v1827 = vmul.f32 %v1507, %v1727
        %v1828 = vmul.f32 %v1508, %v1742
        %v1829 = vmul.f32 %v1509, %v1757
        %v1830 = vmul.f32 %v1510, %v1772
        %v1831 = vmul.f32 %v1511, %v1787
        %v1832 = vmul.f32 %v1512, %v1802
        %v1833 = vmul.f32 %v1513, %v1817
        %v1834 = vld [vmem:[%s5] sm:$0x1]
        %v1836 = vperm.slane %v1834, 0
        %v1838 = vmul.f32 %v1818, %v1836
        %v1839 = vmul.f32 %v1819, %v1836
        %v1840 = vmul.f32 %v1820, %v1836
        %v1841 = vmul.f32 %v1821, %v1836
        %v1842 = vmul.f32 %v1822, %v1836
        %v1843 = vmul.f32 %v1823, %v1836
        %v1844 = vmul.f32 %v1824, %v1836
        %v1845 = vmul.f32 %v1825, %v1836
        %v1846 = vmul.f32 %v1826, %v1836
        %v1847 = vmul.f32 %v1827, %v1836
        %v1848 = vmul.f32 %v1828, %v1836
        %v1849 = vmul.f32 %v1829, %v1836
        %v1850 = vmul.f32 %v1830, %v1836
        %v1851 = vmul.f32 %v1831, %v1836
        %v1852 = vmul.f32 %v1832, %v1836
        %v1853 = vmul.f32 %v1833, %v1836
        %1854 = vadd.xlane.f32.xlu0 %v1838
        %v1855 = vpop.xlane.xlu0 %1854
        %1856 = vadd.xlane.f32.xlu0 %v1839
        %v1857 = vpop.xlane.xlu0 %1856
        %1858 = vadd.xlane.f32.xlu0 %v1840
        %v1859 = vpop.xlane.xlu0 %1858
        %1860 = vadd.xlane.f32.xlu0 %v1841
        %v1861 = vpop.xlane.xlu0 %1860
        %1862 = vadd.xlane.f32.xlu0 %v1842
        %v1863 = vpop.xlane.xlu0 %1862
        %1864 = vadd.xlane.f32.xlu0 %v1843
        %v1865 = vpop.xlane.xlu0 %1864
        %1866 = vadd.xlane.f32.xlu0 %v1844
        %v1867 = vpop.xlane.xlu0 %1866
        %1868 = vadd.xlane.f32.xlu0 %v1845
        %v1869 = vpop.xlane.xlu0 %1868
        %1870 = vadd.xlane.f32.xlu0 %v1846
        %v1871 = vpop.xlane.xlu0 %1870
        %1872 = vadd.xlane.f32.xlu0 %v1847
        %v1873 = vpop.xlane.xlu0 %1872
        %1874 = vadd.xlane.f32.xlu0 %v1848
        %v1875 = vpop.xlane.xlu0 %1874
        %1876 = vadd.xlane.f32.xlu0 %v1849
        %v1877 = vpop.xlane.xlu0 %1876
        %1878 = vadd.xlane.f32.xlu0 %v1850
        %v1879 = vpop.xlane.xlu0 %1878
        %1880 = vadd.xlane.f32.xlu0 %v1851
        %v1881 = vpop.xlane.xlu0 %1880
        %1882 = vadd.xlane.f32.xlu0 %v1852
        %v1883 = vpop.xlane.xlu0 %1882
        %1884 = vadd.xlane.f32.xlu0 %v1853
        %v1885 = vpop.xlane.xlu0 %1884
        %v1886 = vld [vmem:[#allocation5] sm:$0x1]
        %v1888 = vperm.slane %v1886, 0
        %v1890 = vadd.f32 %v1855, %v1888
        %v1891 = vadd.f32 %v1857, %v1888
        %v1892 = vadd.f32 %v1859, %v1888
        %v1893 = vadd.f32 %v1861, %v1888
        %v1894 = vadd.f32 %v1863, %v1888
        %v1895 = vadd.f32 %v1865, %v1888
        %v1896 = vadd.f32 %v1867, %v1888
        %v1897 = vadd.f32 %v1869, %v1888
        %v1898 = vadd.f32 %v1871, %v1888
        %v1899 = vadd.f32 %v1873, %v1888
        %v1900 = vadd.f32 %v1875, %v1888
        %v1901 = vadd.f32 %v1877, %v1888
        %v1902 = vadd.f32 %v1879, %v1888
        %v1903 = vadd.f32 %v1881, %v1888
        %v1904 = vadd.f32 %v1883, %v1888
        %v1905 = vadd.f32 %v1885, %v1888
        %vm1906 = vcmask 7168
        %1907 = vst.msk [vmem:[%s416] sm:$0xff] %vm1906, %v1890
        %1908 = vst.msk [vmem:[%s416 + $0x8] sm:$0xff] %vm1906, %v1891
        %1909 = vst.msk [vmem:[%s416 + $0x10] sm:$0xff] %vm1906, %v1892
        %1910 = vst.msk [vmem:[%s416 + $0x18] sm:$0xff] %vm1906, %v1893
        %1911 = vst.msk [vmem:[%s416 + $0x20] sm:$0xff] %vm1906, %v1894
        %1912 = vst.msk [vmem:[%s416 + $0x28] sm:$0xff] %vm1906, %v1895
        %1913 = vst.msk [vmem:[%s416 + $0x30] sm:$0xff] %vm1906, %v1896
        %1914 = vst.msk [vmem:[%s416 + $0x38] sm:$0xff] %vm1906, %v1897
        %1915 = vst.msk [vmem:[%s416 + $0x40] sm:$0xff] %vm1906, %v1898
        %1916 = vst.msk [vmem:[%s416 + $0x48] sm:$0xff] %vm1906, %v1899
        %1917 = vst.msk [vmem:[%s416 + $0x50] sm:$0xff] %vm1906, %v1900
        %1918 = vst.msk [vmem:[%s416 + $0x58] sm:$0xff] %vm1906, %v1901
        %1919 = vst.msk [vmem:[%s416 + $0x60] sm:$0xff] %vm1906, %v1902
        %1920 = vst.msk [vmem:[%s416 + $0x68] sm:$0xff] %vm1906, %v1903
        %1921 = vst.msk [vmem:[%s416 + $0x70] sm:$0xff] %vm1906, %v1904
        %1922 = vst.msk [vmem:[%s416 + $0x78] sm:$0xff] %vm1906, %v1905
        %v1923 = vsel %vm486, %v1890, -inf
        %v1924 = vsel %vm487, %v1891, -inf
        %v1925 = vsel %vm488, %v1892, -inf
        %v1926 = vsel %vm489, %v1893, -inf
        %v1927 = vsel %vm490, %v1894, -inf
        %v1928 = vsel %vm491, %v1895, -inf
        %v1929 = vsel %vm492, %v1896, -inf
        %v1930 = vsel %vm493, %v1897, -inf
        %v1931 = vsel %vm494, %v1898, -inf
        %v1932 = vsel %vm495, %v1899, -inf
        %v1933 = vsel %vm496, %v1900, -inf
        %v1934 = vsel %vm497, %v1901, -inf
        %v1935 = vsel %vm498, %v1902, -inf
        %v1936 = vsel %vm499, %v1903, -inf
        %v1937 = vsel %vm500, %v1904, -inf
        %v1938 = vsel %vm501, %v1905, -inf
        %v1939 = vld [vmem:[#allocation2] sm:$0x1]
        %v1940 = vsel %vm1906, %v1923, -inf
        %v1941 = vsel %vm1906, %v1924, -inf
        %v1942 = vsel %vm1906, %v1925, -inf
        %v1943 = vsel %vm1906, %v1926, -inf
        %v1944 = vsel %vm1906, %v1927, -inf
        %v1945 = vmax.f32 %v1940, %v1944
        %v1946 = vsel %vm1906, %v1928, -inf
        %v1947 = vmax.f32 %v1941, %v1946
        %v1948 = vsel %vm1906, %v1929, -inf
        %v1949 = vmax.f32 %v1942, %v1948
        %v1950 = vsel %vm1906, %v1930, -inf
        %v1951 = vmax.f32 %v1943, %v1950
        %v1952 = vsel %vm1906, %v1931, -inf
        %v1953 = vmax.f32 %v1945, %v1952
        %v1954 = vsel %vm1906, %v1932, -inf
        %v1955 = vmax.f32 %v1947, %v1954
        %v1956 = vsel %vm1906, %v1933, -inf
        %v1957 = vmax.f32 %v1949, %v1956
        %v1958 = vsel %vm1906, %v1934, -inf
        %v1959 = vmax.f32 %v1951, %v1958
        %v1960 = vsel %vm1906, %v1935, -inf
        %v1961 = vmax.f32 %v1953, %v1960
        %v1962 = vsel %vm1906, %v1936, -inf
        %v1963 = vmax.f32 %v1955, %v1962
        %v1964 = vsel %vm1906, %v1937, -inf
        %v1965 = vmax.f32 %v1957, %v1964
        %v1966 = vsel %vm1906, %v1938, -inf
        %v1967 = vmax.f32 %v1959, %v1966
        %v1968 = vmax.f32 %v1961, %v1963
        %v1969 = vmax.f32 %v1965, %v1967
        %v1970 = vmax.f32 %v1968, %v1969
        %v1971 = vrot.slane %v1970, 4
        %v1972 = vmax.f32 %v1970, %v1971
        %v1973 = vrot.slane %v1972, 2
        %v1974 = vmax.f32 %v1972, %v1973
        %v1975 = vrot.slane %v1974, 1
        %v1976 = vmax.f32 %v1974, %v1975
        %v1977 = vmax.f32 %v1939, %v1976
        %v1978 = vsub.f32 %v1939, %v1977
        %v1979 = vmul.f32 %v1978, 1.442695
        %v1980 = vpow.pop %v1979
        %v1982 = vperm.slane %v1977, 0
        %v1984 = vsub.f32 %v1923, %v1982
        %v1985 = vsub.f32 %v1924, %v1982
        %v1986 = vsub.f32 %v1925, %v1982
        %v1987 = vsub.f32 %v1926, %v1982
        %v1988 = vsub.f32 %v1927, %v1982
        %v1989 = vsub.f32 %v1928, %v1982
        %v1990 = vsub.f32 %v1929, %v1982
        %v1991 = vsub.f32 %v1930, %v1982
        %v1992 = vsub.f32 %v1931, %v1982
        %v1993 = vsub.f32 %v1932, %v1982
        %v1994 = vsub.f32 %v1933, %v1982
        %v1995 = vsub.f32 %v1934, %v1982
        %v1996 = vsub.f32 %v1935, %v1982
        %v1997 = vsub.f32 %v1936, %v1982
        %v1998 = vsub.f32 %v1937, %v1982
        %v1999 = vsub.f32 %v1938, %v1982
        %v2000 = vmul.f32 %v1984, 1.442695
        %v2001 = vpow.pop %v2000
        %v2002 = vmul.f32 %v1985, 1.442695
        %v2003 = vpow.pop %v2002
        %v2004 = vmul.f32 %v1986, 1.442695
        %v2005 = vpow.pop %v2004
        %v2006 = vmul.f32 %v1987, 1.442695
        %v2007 = vpow.pop %v2006
        %v2008 = vmul.f32 %v1988, 1.442695
        %v2009 = vpow.pop %v2008
        %v2010 = vmul.f32 %v1989, 1.442695
        %v2011 = vpow.pop %v2010
        %v2012 = vmul.f32 %v1990, 1.442695
        %v2013 = vpow.pop %v2012
        %v2014 = vmul.f32 %v1991, 1.442695
        %v2015 = vpow.pop %v2014
        %v2016 = vmul.f32 %v1992, 1.442695
        %v2017 = vpow.pop %v2016
        %v2018 = vmul.f32 %v1993, 1.442695
        %v2019 = vpow.pop %v2018
        %v2020 = vmul.f32 %v1994, 1.442695
        %v2021 = vpow.pop %v2020
        %v2022 = vmul.f32 %v1995, 1.442695
        %v2023 = vpow.pop %v2022
        %v2024 = vmul.f32 %v1996, 1.442695
        %v2025 = vpow.pop %v2024
        %v2026 = vmul.f32 %v1997, 1.442695
        %v2027 = vpow.pop %v2026
        %v2028 = vmul.f32 %v1998, 1.442695
        %v2029 = vpow.pop %v2028
        %v2030 = vmul.f32 %v1999, 1.442695
        %v2031 = vpow.pop %v2030
        %v2032 = vsel %vm486, %v2001, 0.0
        %v2033 = vsel %vm487, %v2003, 0.0
        %v2034 = vsel %vm488, %v2005, 0.0
        %v2035 = vsel %vm489, %v2007, 0.0
        %v2036 = vsel %vm490, %v2009, 0.0
        %v2037 = vsel %vm491, %v2011, 0.0
        %v2038 = vsel %vm492, %v2013, 0.0
        %v2039 = vsel %vm493, %v2015, 0.0
        %v2040 = vsel %vm494, %v2017, 0.0
        %v2041 = vsel %vm495, %v2019, 0.0
        %v2042 = vsel %vm496, %v2021, 0.0
        %v2043 = vsel %vm497, %v2023, 0.0
        %v2044 = vsel %vm498, %v2025, 0.0
        %v2045 = vsel %vm499, %v2027, 0.0
        %v2046 = vsel %vm500, %v2029, 0.0
        %v2047 = vsel %vm501, %v2031, 0.0
        %v2048 = vld [vmem:[#allocation3] sm:$0x1]
        %v2049 = vmul.f32 %v1980, %v2048
        %v2050 = vsel %vm1906, %v2032, 0.0
        %v2051 = vsel %vm1906, %v2033, 0.0
        %v2052 = vadd.f32 %v2050, %v2051
        %v2053 = vsel %vm1906, %v2034, 0.0
        %v2054 = vadd.f32 %v2052, %v2053
        %v2055 = vsel %vm1906, %v2035, 0.0
        %v2056 = vadd.f32 %v2054, %v2055
        %v2057 = vsel %vm1906, %v2036, 0.0
        %v2058 = vadd.f32 %v2056, %v2057
        %v2059 = vsel %vm1906, %v2037, 0.0
        %v2060 = vadd.f32 %v2058, %v2059
        %v2061 = vsel %vm1906, %v2038, 0.0
        %v2062 = vadd.f32 %v2060, %v2061
        %v2063 = vsel %vm1906, %v2039, 0.0
        %v2064 = vadd.f32 %v2062, %v2063
        %v2065 = vsel %vm1906, %v2040, 0.0
        %v2066 = vadd.f32 %v2064, %v2065
        %v2067 = vsel %vm1906, %v2041, 0.0
        %v2068 = vadd.f32 %v2066, %v2067
        %v2069 = vsel %vm1906, %v2042, 0.0
        %v2070 = vadd.f32 %v2068, %v2069
        %v2071 = vsel %vm1906, %v2043, 0.0
        %v2072 = vadd.f32 %v2070, %v2071
        %v2073 = vsel %vm1906, %v2044, 0.0
        %v2074 = vadd.f32 %v2072, %v2073
        %v2075 = vsel %vm1906, %v2045, 0.0
        %v2076 = vadd.f32 %v2074, %v2075
        %v2077 = vsel %vm1906, %v2046, 0.0
        %v2078 = vadd.f32 %v2076, %v2077
        %v2079 = vsel %vm1906, %v2047, 0.0
        %v2080 = vadd.f32 %v2078, %v2079
        %v2081 = vrot.slane %v2080, 4
        %v2082 = vadd.f32 %v2080, %v2081
        %v2083 = vrot.slane %v2082, 2
        %v2084 = vadd.f32 %v2082, %v2083
        %v2085 = vrot.slane %v2084, 1
        %v2086 = vadd.f32 %v2084, %v2085
        %v2087 = vadd.f32 %v2049, %v2086
        %vm2088 = vcmask 0
        %2089 = vst.msk [vmem:[#allocation3] sm:$0x1] %vm2088, %v2087
        %v2090 = vld [vmem:[#allocation4] sm:$0x3]
        %2092 = vset.pattern.permute.xlu0 0
        %2093 = vperm.xlu0 %2092, %v1980
        %v2094 = vpop.permute.xlu0 %2093
        %v2096 = vperm.slane %v2094, 0
        %v2097 = vmul.f32 %v2096, %v2090
        %2099 = vset.pattern.permute.xlu0 0
        %2100 = vperm.xlu0 %2099, %v2032
        %v2101 = vpop.permute.xlu0 %2100
        %2104 = vset.pattern.permute.xlu0 0
        %2105 = vperm.xlu0 %2104, %v2033
        %v2106 = vpop.permute.xlu0 %2105
        %2109 = vset.pattern.permute.xlu0 0
        %2110 = vperm.xlu0 %2109, %v2034
        %v2111 = vpop.permute.xlu0 %2110
        %2114 = vset.pattern.permute.xlu0 0
        %2115 = vperm.xlu0 %2114, %v2035
        %v2116 = vpop.permute.xlu0 %2115
        %2119 = vset.pattern.permute.xlu0 0
        %2120 = vperm.xlu0 %2119, %v2036
        %v2121 = vpop.permute.xlu0 %2120
        %2124 = vset.pattern.permute.xlu0 0
        %2125 = vperm.xlu0 %2124, %v2037
        %v2126 = vpop.permute.xlu0 %2125
        %2129 = vset.pattern.permute.xlu0 0
        %2130 = vperm.xlu0 %2129, %v2038
        %v2131 = vpop.permute.xlu0 %2130
        %2134 = vset.pattern.permute.xlu0 0
        %2135 = vperm.xlu0 %2134, %v2039
        %v2136 = vpop.permute.xlu0 %2135
        %2139 = vset.pattern.permute.xlu0 0
        %2140 = vperm.xlu0 %2139, %v2040
        %v2141 = vpop.permute.xlu0 %2140
        %2144 = vset.pattern.permute.xlu0 0
        %2145 = vperm.xlu0 %2144, %v2041
        %v2146 = vpop.permute.xlu0 %2145
        %2149 = vset.pattern.permute.xlu0 0
        %2150 = vperm.xlu0 %2149, %v2042
        %v2151 = vpop.permute.xlu0 %2150
        %2154 = vset.pattern.permute.xlu0 0
        %2155 = vperm.xlu0 %2154, %v2043
        %v2156 = vpop.permute.xlu0 %2155
        %2159 = vset.pattern.permute.xlu0 0
        %2160 = vperm.xlu0 %2159, %v2044
        %v2161 = vpop.permute.xlu0 %2160
        %2164 = vset.pattern.permute.xlu0 0
        %2165 = vperm.xlu0 %2164, %v2045
        %v2166 = vpop.permute.xlu0 %2165
        %2169 = vset.pattern.permute.xlu0 0
        %2170 = vperm.xlu0 %2169, %v2046
        %v2171 = vpop.permute.xlu0 %2170
        %2174 = vset.pattern.permute.xlu0 0
        %2175 = vperm.xlu0 %2174, %v2047
        %v2176 = vpop.permute.xlu0 %2175
        %v2178 = vmul.f32 %v2101, %v1056
        %v2179 = vmul.f32 %v2101, %v1057
        %v2180 = vmul.f32 %v2106, %v1058
        %v2181 = vmul.f32 %v2106, %v1059
        %v2182 = vmul.f32 %v2111, %v1060
        %v2183 = vmul.f32 %v2111, %v1061
        %v2184 = vmul.f32 %v2116, %v1062
        %v2185 = vmul.f32 %v2116, %v1063
        %v2186 = vmul.f32 %v2121, %v1064
        %v2187 = vmul.f32 %v2121, %v1065
        %v2188 = vmul.f32 %v2126, %v1066
        %v2189 = vmul.f32 %v2126, %v1067
        %v2190 = vmul.f32 %v2131, %v1068
        %v2191 = vmul.f32 %v2131, %v1069
        %v2192 = vmul.f32 %v2136, %v1070
        %v2193 = vmul.f32 %v2136, %v1071
        %v2194 = vmul.f32 %v2141, %v1072
        %v2195 = vmul.f32 %v2141, %v1073
        %v2196 = vmul.f32 %v2146, %v1074
        %v2197 = vmul.f32 %v2146, %v1075
        %v2198 = vmul.f32 %v2151, %v1076
        %v2199 = vmul.f32 %v2151, %v1077
        %v2200 = vmul.f32 %v2156, %v1078
        %v2201 = vmul.f32 %v2156, %v1079
        %v2202 = vmul.f32 %v2161, %v1080
        %v2203 = vmul.f32 %v2161, %v1081
        %v2204 = vmul.f32 %v2166, %v1082
        %v2205 = vmul.f32 %v2166, %v1083
        %v2206 = vmul.f32 %v2171, %v1084
        %v2207 = vmul.f32 %v2171, %v1085
        %v2208 = vmul.f32 %v2176, %v1086
        %v2209 = vmul.f32 %v2176, %v1087
        %v2210 = vadd.f32 %v2178, %v2180
        %v2211 = vadd.f32 %v2210, %v2182
        %v2212 = vadd.f32 %v2211, %v2184
        %v2213 = vadd.f32 %v2212, %v2186
        %v2214 = vadd.f32 %v2213, %v2188
        %v2215 = vadd.f32 %v2214, %v2190
        %v2216 = vadd.f32 %v2215, %v2192
        %v2217 = vadd.f32 %v2216, %v2194
        %v2218 = vadd.f32 %v2217, %v2196
        %v2219 = vadd.f32 %v2218, %v2198
        %v2220 = vadd.f32 %v2219, %v2200
        %v2221 = vadd.f32 %v2220, %v2202
        %v2222 = vadd.f32 %v2221, %v2204
        %v2223 = vadd.f32 %v2222, %v2206
        %v2224 = vadd.f32 %v2223, %v2208
        %v2225 = vrot.slane %v2224, 4
        %v2226 = vadd.f32 %v2224, %v2225
        %v2227 = vrot.slane %v2226, 2
        %v2228 = vadd.f32 %v2226, %v2227
        %v2229 = vrot.slane %v2228, 1
        %v2230 = vadd.f32 %v2228, %v2229
        %v2231 = vadd.f32 %v2179, %v2181
        %v2232 = vadd.f32 %v2231, %v2183
        %v2233 = vadd.f32 %v2232, %v2185
        %v2234 = vadd.f32 %v2233, %v2187
        %v2235 = vadd.f32 %v2234, %v2189
        %v2236 = vadd.f32 %v2235, %v2191
        %v2237 = vadd.f32 %v2236, %v2193
        %v2238 = vadd.f32 %v2237, %v2195
        %v2239 = vadd.f32 %v2238, %v2197
        %v2240 = vadd.f32 %v2239, %v2199
        %v2241 = vadd.f32 %v2240, %v2201
        %v2242 = vadd.f32 %v2241, %v2203
        %v2243 = vadd.f32 %v2242, %v2205
        %v2244 = vadd.f32 %v2243, %v2207
        %v2245 = vadd.f32 %v2244, %v2209
        %v2246 = vrot.slane %v2245, 4
        %v2247 = vadd.f32 %v2245, %v2246
        %v2248 = vrot.slane %v2247, 2
        %v2249 = vadd.f32 %v2247, %v2248
        %v2250 = vrot.slane %v2249, 1
        %v2251 = vadd.f32 %v2249, %v2250
        %v2254 = vrot.slane %v2251, 7
        %vm2255 = vcmask 1040384
        %v2256 = vsel %vm2255, %v2230, %v2254
        %v2258 = vadd.f32 %v2097, %v2256
        %v2259 = vlaneseq
        %vm2260 = vcmp.ge.s32.totalorder %v2259, 0
        %vm2261 = vcmp.lt.s32.totalorder %v2259, 256
        %vm2262 = vmand %vm2260, %vm2261
        %2263 = vst.msk [vmem:[#allocation4] sm:$0x3] %vm2262, %v2258
        %2264 = vst.msk [vmem:[#allocation2] sm:$0x1] %vm2088, %v1977
        %p2265 = scmp.eq.s32.totalorder %s28, 2
        // Predicated region
        $region61: #{mil_attention_fc_surv_forward.1} parent=55 // pred_check
          %p2266 = pneg %p2265
        $region62: #{mil_attention_fc_surv_forward.1} parent=55 // pred_check_branch
          %2268 = sbr.rel (%p2266) target = $region64
        $region63: #{mil_attention_fc_surv_forward.1} parent=55 // pred_region
          %v2269 = vld [vmem:[#allocation4] sm:$0x3]
          %v2270 = vld [vmem:[#allocation3] sm:$0x1]
          %2272 = vset.pattern.permute.xlu0 0
          %2273 = vperm.xlu0 %2272, %v2270
          %v2274 = vpop.permute.xlu0 %2273
          %v2276 = vperm.slane %v2274, 0
          %v2277 = vrcp.pop %v2276
          %v2278 = vmul.f32 %v2276, %v2277
          %v2279 = vsub.f32 1.0, %v2278
          %v2280 = vmul.f32 %v2277, %v2279
          %v2281 = vadd.f32 %v2277, %v2280
          %vm2282 = vweird.f32 %v2276
          %vm2283 = vweird.f32 %v2277
          %vm2284 = vmor %vm2282, %vm2283
          %v2285 = vsel %vm2284, %v2277, %v2281
          %v2286 = vand.u32 2147483647, %v2276
          %vm2287 = vcmp.eq.f32.partialorder %v2286, 8.507059e+37
          %v2288 = vand.u32 %v2276, 2147483648
          %v2289 = vor.u32 1.1754944e-38, %v2288
          %v2290 = vsel %vm2287, %v2289, %v2285
          %v2291 = vmul.f32 %v2269, %v2290
          %v2292 = vld [vmem:[%s7] sm:$0xff]
          %v2293 = vld [vmem:[%s7 + $0x8] sm:$0xff]
          %v2294 = vld [vmem:[%s7 + $0x10] sm:$0xff]
          %v2295 = vld [vmem:[%s7 + $0x18] sm:$0xff]
          %v2296 = vld [vmem:[%s7 + $0x20] sm:$0xff]
          %v2297 = vld [vmem:[%s7 + $0x28] sm:$0xff]
          %v2298 = vld [vmem:[%s7 + $0x30] sm:$0xff]
          %v2299 = vld [vmem:[%s7 + $0x38] sm:$0xff]
          %v2300 = vld [vmem:[%s7 + $0x40] sm:$0xff]
          %v2301 = vld [vmem:[%s7 + $0x48] sm:$0xff]
          %v2302 = vld [vmem:[%s7 + $0x50] sm:$0xff]
          %v2303 = vld [vmem:[%s7 + $0x58] sm:$0xff]
          %v2304 = vld [vmem:[%s7 + $0x60] sm:$0xff]
          %v2305 = vld [vmem:[%s7 + $0x68] sm:$0xff]
          %v2306 = vld [vmem:[%s7 + $0x70] sm:$0xff]
          %v2307 = vld [vmem:[%s7 + $0x78] sm:$0xff]
          %v2308 = vld [vmem:[%s7 + $0x80] sm:$0xff]
          %v2309 = vld [vmem:[%s7 + $0x88] sm:$0xff]
          %v2310 = vld [vmem:[%s7 + $0x90] sm:$0xff]
          %v2311 = vld [vmem:[%s7 + $0x98] sm:$0xff]
          %v2312 = vld [vmem:[%s7 + $0xa0] sm:$0xff]
          %v2313 = vld [vmem:[%s7 + $0xa8] sm:$0xff]
          %v2314 = vld [vmem:[%s7 + $0xb0] sm:$0xff]
          %v2315 = vld [vmem:[%s7 + $0xb8] sm:$0xff]
          %v2316 = vld [vmem:[%s7 + $0xc0] sm:$0xff]
          %v2317 = vld [vmem:[%s7 + $0xc8] sm:$0xff]
          %v2318 = vld [vmem:[%s7 + $0xd0] sm:$0xff]
          %v2319 = vld [vmem:[%s7 + $0xd8] sm:$0xff]
          %v2320 = vld [vmem:[%s7 + $0xe0] sm:$0xff]
          %v2321 = vld [vmem:[%s7 + $0xe8] sm:$0xff]
          %v2322 = vld [vmem:[%s7 + $0xf0] sm:$0xff]
          %v2323 = vld [vmem:[%s7 + $0xf8] sm:$0xff]
          %v2324 = vld [vmem:[%s8] sm:$0x1]
          %v2326 = vperm.slane %v2291, 0
          %v2327 = vperm.slane %v2291, 1
          %2330 = vmatpush.msra.mxu0 %v2307
          %2331 = vmatpush.msra.mxu0 %v2306
          %2332 = vmatpush.msra.mxu0 %v2305
          %2333 = vmatpush.msra.mxu0 %v2304
          %2334 = vmatpush.msra.mxu0 %v2303
          %2335 = vmatpush.msra.mxu0 %v2302
          %2336 = vmatpush.msra.mxu0 %v2301
          %2337 = vmatpush.msra.mxu0 %v2300
          %2338 = vmatpush.msra.mxu0 %v2299
          %2339 = vmatpush.msra.mxu0 %v2298
          %2340 = vmatpush.msra.mxu0 %v2297
          %2341 = vmatpush.msra.mxu0 %v2296
          %2342 = vmatpush.msra.mxu0 %v2295
          %2343 = vmatpush.msra.mxu0 %v2294
          %2344 = vmatpush.msra.mxu0 %v2293
          %2345 = vmatpush.msra.mxu0 %v2292
          %2346 = vmatmul.f32.gmra.mxu0 %v2326
          %v2347 = vpop.f32.mrf.mxu0
          %v2348 = vadd.f32 %v2324, %v2347
          %2349 = vdwg.mxu0
          %2350 = vmatpush.msra.mxu0 %v2323
          %2351 = vmatpush.msra.mxu0 %v2322
          %2352 = vmatpush.msra.mxu0 %v2321
          %2353 = vmatpush.msra.mxu0 %v2320
          %2354 = vmatpush.msra.mxu0 %v2319
          %2355 = vmatpush.msra.mxu0 %v2318
          %2356 = vmatpush.msra.mxu0 %v2317
          %2357 = vmatpush.msra.mxu0 %v2316
          %2358 = vmatpush.msra.mxu0 %v2315
          %2359 = vmatpush.msra.mxu0 %v2314
          %2360 = vmatpush.msra.mxu0 %v2313
          %2361 = vmatpush.msra.mxu0 %v2312
          %2362 = vmatpush.msra.mxu0 %v2311
          %2363 = vmatpush.msra.mxu0 %v2310
          %2364 = vmatpush.msra.mxu0 %v2309
          %2365 = vmatpush.msra.mxu0 %v2308
          %2366 = vmatmul.f32.gmra.mxu0 %v2327
          %v2367 = vpop.f32.mrf.mxu0
          %v2368 = vadd.f32 %v2348, %v2367
          %2369 = vdwg.mxu0
          %v2370 = vxor.u32 %v2368, 2147483648
          %v2371 = vmul.f32 %v2370, 1.442695
          %v2372 = vpow.pop %v2371
          %v2373 = vadd.f32 %v2372, 1.0
          %v2374 = vrcp.pop %v2373
          %v2375 = vmul.f32 %v2373, %v2374
          %v2376 = vsub.f32 1.0, %v2375
          %v2377 = vmul.f32 %v2374, %v2376
          %v2378 = vadd.f32 %v2374, %v2377
          %vm2379 = vweird.f32 %v2373
          %vm2380 = vweird.f32 %v2374
          %vm2381 = vmor %vm2379, %vm2380
          %v2382 = vsel %vm2381, %v2374, %v2378
          %v2383 = vand.u32 2147483647, %v2373
          %vm2384 = vcmp.eq.f32.partialorder %v2383, 8.507059e+37
          %v2385 = vand.u32 %v2373, 2147483648
          %v2386 = vor.u32 1.1754944e-38, %v2385
          %v2387 = vsel %vm2384, %v2386, %v2382
          %v2388 = vmul.f32 1.0, %v2387
          %vm2389 = vcmask 24576
          %2390 = vst.msk [vmem:[#allocation6] sm:$0x1] %vm2389, %v2388
          %v2391 = vlaneseq
          %v2392 = vand.u32 %v2391, 127
          %v2393 = vsel %vm2389, %v2368, -inf
          %2394 = vmax.xlane.f32.xlu0 %v2393
          %v2395 = vpop.xlane.xlu0 %2394
          %vm2396 = vcmp.ge.f32.partialorder %v2368, %v2395
          %v2397 = vsel %vm2396, %v2392, 4
          %v2398 = vsel %vm2389, %v2397, 2147483647
          %v2399 = vand.u32 %v2398, 65535
          %v2400 = vshra.s32 %v2398, 16
          %v2401 = vcvt.s32.f32 %v2399
          %v2402 = vcvt.s32.f32 %v2400
          %2403 = vmin.xlane.f32.xlu0 %v2402
          %v2404 = vpop.xlane.xlu0 %2403
          %vm2405 = vcmp.eq.f32.partialorder %v2402, %v2404
          %v2406 = vsel %vm2405, %v2401, inf
          %2407 = vmin.xlane.f32.xlu0 %v2406
          %v2408 = vpop.xlane.xlu0 %2407
          %v2409 = vcvt.f32.s32 %v2408
          %v2410 = vcvt.f32.s32 %v2404
          %v2411 = vshll.u32 %v2410, 16
          %v2412 = vadd.s32 %v2411, %v2409
          %2413 = vst.msk [vmem:[#allocation10] sm:$0x1] %vm2088, %v2412
          %v2414 = vsub.f32 1.0, %v2388
          %vm2415 = vcmp.eq.s32.totalorder %v2392, 0
          %v2416 = vsel %vm2415, %v2414, 0.0
          %v2417 = vsel %vm2389, %v2416, 0.0
          %2418 = vadd.xlane.f32.xlu0 %v2417
          %v2419 = vpop.xlane.xlu0 %2418
          %v2420 = vsel %vm2415, %v2419, 0.0
          %vm2421 = vcmp.eq.s32.totalorder %v2392, 1
          %v2422 = vsel %vm2421, %v2414, 0.0
          %v2423 = vsel %vm2389, %v2422, 0.0
          %2424 = vadd.xlane.f32.xlu0 %v2423
          %v2425 = vpop.xlane.xlu0 %2424
          %v2426 = vmul.f32 %v2419, %v2425
          %v2427 = vsel %vm2421, %v2426, %v2420
          %vm2428 = vcmp.eq.s32.totalorder %v2392, 2
          %v2429 = vsel %vm2428, %v2414, 0.0
          %v2430 = vsel %vm2389, %v2429, 0.0
          %2431 = vadd.xlane.f32.xlu0 %v2430
          %v2432 = vpop.xlane.xlu0 %2431
          %v2433 = vmul.f32 %v2426, %v2432
          %v2434 = vsel %vm2428, %v2433, %v2427
          %vm2435 = vcmp.eq.s32.totalorder %v2392, 3
          %v2436 = vsel %vm2435, %v2414, 0.0
          %v2437 = vsel %vm2389, %v2436, 0.0
          %2438 = vadd.xlane.f32.xlu0 %v2437
          %v2439 = vpop.xlane.xlu0 %2438
          %v2440 = vmul.f32 %v2433, %v2439
          %v2441 = vsel %vm2435, %v2440, %v2434
          %2442 = vst.msk [vmem:[#allocation8] sm:$0x1] %vm2389, %v2441
        $region64: #{mil_attention_fc_surv_forward.1} parent=55 // pred_fallthru
          _
        %s2443 = sand.u32 %s293, 1
        %s2444 = sand.u32 %s293, 1
        %s2445 = smul.addr %s2444, 128
        %s2446 = scalar_lea.vmem [#allocation11], %s2445
        // Predicated region
        $region65: #{mil_attention_fc_surv_forward.1} parent=55 // pred_check
          %p2447 = pneg %p235
        $region66: #{mil_attention_fc_surv_forward.1} parent=55 // pred_check_branch
          %2449 = sbr.rel (%p2447) target = $region68
        $region67: #{mil_attention_fc_surv_forward.1} parent=55 // pred_region
          %2451 = vsyncadd [#allocation7], 0
          %s2453 = sshll.u32 [#allocation6], 4
          %s2454 = int_to_ptr.vmem [resolvable:$true] %s2453
          %s2455 = sshll.u32 %s9, 4
          %s2456 = int_to_ptr.hbm [resolvable:$true] %s2455
          %2458 = dma.vmem_to_hbm [thread:$0]  %s2454, 16, %s2456, [#allocation7]
        $region68: #{mil_attention_fc_surv_forward.1} parent=55 // pred_fallthru
          _
        // Predicated region
        $region69: #{mil_attention_fc_surv_forward.1} parent=55 // pred_check
          %p2459 = pneg %p256
        $region70: #{mil_attention_fc_surv_forward.1} parent=55 // pred_check_branch
          %2461 = sbr.rel (%p2459) target = $region72
        $region71: #{mil_attention_fc_surv_forward.1} parent=55 // pred_region
          %2463 = vsyncadd [#allocation9], 0
          %s2465 = sshll.u32 [#allocation8], 4
          %s2466 = int_to_ptr.vmem [resolvable:$true] %s2465
          %s2467 = sshll.u32 %s10, 4
          %s2468 = int_to_ptr.hbm [resolvable:$true] %s2467
          %2470 = dma.vmem_to_hbm [thread:$0]  %s2466, 16, %s2468, [#allocation9]
        $region72: #{mil_attention_fc_surv_forward.1} parent=55 // pred_fallthru
          _
        // Predicated region
        $region73: #{mil_attention_fc_surv_forward.1} parent=55 // pred_check
          %p2471 = pneg %p277
        $region74: #{mil_attention_fc_surv_forward.1} parent=55 // pred_check_branch
          %2473 = sbr.rel (%p2471) target = $region76
        $region75: #{mil_attention_fc_surv_forward.1} parent=55 // pred_region
          %2475 = vsyncadd [#allocation9], 0
          %s2477 = sshll.u32 [#allocation10], 4
          %s2478 = int_to_ptr.vmem [resolvable:$true] %s2477
          %s2479 = sshll.u32 %s11, 4
          %s2480 = int_to_ptr.hbm [resolvable:$true] %s2479
          %2482 = dma.vmem_to_hbm [thread:$0]  %s2478, 16, %s2480, [#allocation9]
        $region76: #{mil_attention_fc_surv_forward.1} parent=55 // pred_fallthru
          _
        // Predicated region
        $region77: #{mil_attention_fc_surv_forward.1} parent=55 // pred_check
          %p2483 = pneg %p303
        $region78: #{mil_attention_fc_surv_forward.1} parent=55 // pred_check_branch
          %2485 = sbr.rel (%p2483) target = $region80
        $region79: #{mil_attention_fc_surv_forward.1} parent=55 // pred_region
          %s2486 = smul.u32 16, %s28
          %s2487 = ssub.s32 38, %s2486
          %p2488 = scmp.lt.s32.totalorder %s2487, 16
          %s2489 = scalar_select %p2488, %s2487, 16
          %s2490 = smul.u32 8, %s2489
          %p2491 = scmp.ne.s32.totalorder 0, %s2490
          %s2492 = smul.addr %s2486, 8
          %s2493 = scalar_lea.vmem %s12, %s2492
          // Predicated region
          $region81: #{mil_attention_fc_surv_forward.1} parent=79 // pred_check
            %p2494 = pneg %p2491
          $region82: #{mil_attention_fc_surv_forward.1} parent=79 // pred_check_branch
            %2496 = sbr.rel (%p2494) target = $region84
          $region83: #{mil_attention_fc_surv_forward.1} parent=79 // pred_region
            // Predicated region
            $region85: #{mil_attention_fc_surv_forward.1} parent=83 // pred_check
              _
            $region86: #{mil_attention_fc_surv_forward.1} parent=83 // pred_check_branch
              %2498 = sbr.rel (0) target = $region88
            $region87: #{mil_attention_fc_surv_forward.1} parent=83 // pred_region
              // Predicated region
              $region107: #{mil_attention_fc_surv_forward.1} parent=87 // pred_check
                _
              $region108: #{mil_attention_fc_surv_forward.1} parent=87 // pred_check_branch
                %2578 = sbr.rel (0) target = $region110
              $region109: #{mil_attention_fc_surv_forward.1} parent=87 // pred_region
                %s2579 = sshrl.u32 %s2489, 4
                // While loop
                $region111: #{mil_attention_fc_surv_forward.1} parent=109 // loop_pre_header
                  _
                $region112: #{mil_attention_fc_surv_forward.1} parent=109 // loop_header
                  %s2581 = sphi 0, %s2583
                  %p2582 = scmp.ge.s32.totalorder %s2581, %s2579
                  %s2586 = sphi 0, %s2623
                  %s2587 = sphi %s2446, %s2626
                  %s2588 = sphi %s2493, %s2627
                $region113: #{mil_attention_fc_surv_forward.1} parent=109 // loop_header_branch
                  %2585 = sbr.rel (%p2582) target = $region117
                $region114: #{mil_attention_fc_surv_forward.1} parent=109 // loop_body
                  %v2589 = vld [vmem:[%s2587] sm:$0xff]
                  %2590 = vst [vmem:[%s2588] sm:$0xff] %v2589
                  %v2591 = vld [vmem:[%s2587 + $0x8] sm:$0xff]
                  %2592 = vst [vmem:[%s2588 + $0x8] sm:$0xff] %v2591
                  %v2593 = vld [vmem:[%s2587 + $0x10] sm:$0xff]
                  %2594 = vst [vmem:[%s2588 + $0x10] sm:$0xff] %v2593
                  %v2595 = vld [vmem:[%s2587 + $0x18] sm:$0xff]
                  %2596 = vst [vmem:[%s2588 + $0x18] sm:$0xff] %v2595
                  %v2597 = vld [vmem:[%s2587 + $0x20] sm:$0xff]
                  %2598 = vst [vmem:[%s2588 + $0x20] sm:$0xff] %v2597
                  %v2599 = vld [vmem:[%s2587 + $0x28] sm:$0xff]
                  %2600 = vst [vmem:[%s2588 + $0x28] sm:$0xff] %v2599
                  %v2601 = vld [vmem:[%s2587 + $0x30] sm:$0xff]
                  %2602 = vst [vmem:[%s2588 + $0x30] sm:$0xff] %v2601
                  %v2603 = vld [vmem:[%s2587 + $0x38] sm:$0xff]
                  %2604 = vst [vmem:[%s2588 + $0x38] sm:$0xff] %v2603
                  %v2605 = vld [vmem:[%s2587 + $0x40] sm:$0xff]
                  %2606 = vst [vmem:[%s2588 + $0x40] sm:$0xff] %v2605
                  %v2607 = vld [vmem:[%s2587 + $0x48] sm:$0xff]
                  %2608 = vst [vmem:[%s2588 + $0x48] sm:$0xff] %v2607
                  %v2609 = vld [vmem:[%s2587 + $0x50] sm:$0xff]
                  %2610 = vst [vmem:[%s2588 + $0x50] sm:$0xff] %v2609
                  %v2611 = vld [vmem:[%s2587 + $0x58] sm:$0xff]
                  %2612 = vst [vmem:[%s2588 + $0x58] sm:$0xff] %v2611
                  %v2613 = vld [vmem:[%s2587 + $0x60] sm:$0xff]
                  %2614 = vst [vmem:[%s2588 + $0x60] sm:$0xff] %v2613
                  %v2615 = vld [vmem:[%s2587 + $0x68] sm:$0xff]
                  %2616 = vst [vmem:[%s2588 + $0x68] sm:$0xff] %v2615
                  %v2617 = vld [vmem:[%s2587 + $0x70] sm:$0xff]
                  %2618 = vst [vmem:[%s2588 + $0x70] sm:$0xff] %v2617
                  %v2619 = vld [vmem:[%s2587 + $0x78] sm:$0xff]
                  %2620 = vst [vmem:[%s2588 + $0x78] sm:$0xff] %v2619
                  %s2621 = sadd.s32 1, %s2586
                  %p2622 = scmp.ge.s32.totalorder %s2621, %s2579
                  %s2623 = scalar_select %p2622, 0, %s2621
                  %s2624 = smul.u32 %s2623, 128
                  %s2625 = smul.u32 %s2623, 128
                  %s2626 = scalar_lea.vmem %s2446, %s2624 [#allocation11]
                  %s2627 = scalar_lea.vmem %s2493, %s2625
                $region115: #{mil_attention_fc_surv_forward.1} parent=109 // loop_footer
                  %s2583 = sadd.s32 %s2581, 1
                $region116: #{mil_attention_fc_surv_forward.1} parent=109 // loop_footer_branch
                  %2580 = sbr.rel target = $region112
                $region117: #{mil_attention_fc_surv_forward.1} parent=109 // loop_exit
                  _
                %s2628 = sshrl.u32 %s2489, 4
                %s2629 = sand.u32 %s2489, 15
                %s2630 = smul.u32 %s2628, 16
                %s2631 = smul.u32 8, %s2630
                %s2632 = scalar_lea.vmem %s2446, %s2631 [#allocation11]
                %s2633 = smul.u32 8, %s2630
                %s2634 = scalar_lea.vmem %s2493, %s2633
                // While loop
                $region118: #{mil_attention_fc_surv_forward.1} parent=109 // loop_pre_header
                  _
                $region119: #{mil_attention_fc_surv_forward.1} parent=109 // loop_header
                  %s2636 = sphi 0, %s2638
                  %p2637 = scmp.ge.s32.totalorder %s2636, %s2629
                  %s2641 = sphi 0, %s2648
                  %s2642 = sphi %s2632, %s2651
                  %s2643 = sphi %s2634, %s2652
                $region120: #{mil_attention_fc_surv_forward.1} parent=109 // loop_header_branch
                  %2640 = sbr.rel (%p2637) target = $region124
                $region121: #{mil_attention_fc_surv_forward.1} parent=109 // loop_body
                  %v2644 = vld [vmem:[%s2642] sm:$0xff]
                  %2645 = vst [vmem:[%s2643] sm:$0xff] %v2644
                  %s2646 = sadd.s32 1, %s2641
                  %p2647 = scmp.ge.s32.totalorder %s2646, %s2629
                  %s2648 = scalar_select %p2647, 0, %s2646
                  %s2649 = smul.u32 %s2648, 8
                  %s2650 = smul.u32 %s2648, 8
                  %s2651 = scalar_lea.vmem %s2632, %s2649 [#allocation11]
                  %s2652 = scalar_lea.vmem %s2634, %s2650
                $region122: #{mil_attention_fc_surv_forward.1} parent=109 // loop_footer
                  %s2638 = sadd.s32 %s2636, 1
                $region123: #{mil_attention_fc_surv_forward.1} parent=109 // loop_footer_branch
                  %2635 = sbr.rel target = $region119
                $region124: #{mil_attention_fc_surv_forward.1} parent=109 // loop_exit
                  _
              $region110: #{mil_attention_fc_surv_forward.1} parent=87 // pred_fallthru
                _
              // Predicated region
              $region125: #{mil_attention_fc_surv_forward.1} parent=87 // pred_check
                _
              $region126: #{mil_attention_fc_surv_forward.1} parent=87 // pred_check_branch
                %2654 = sbr.rel target = $region128
              $region127: #{mil_attention_fc_surv_forward.1} parent=87 // pred_region
                _
              $region128: #{mil_attention_fc_surv_forward.1} parent=87 // pred_fallthru
                _
            $region88: #{mil_attention_fc_surv_forward.1} parent=83 // pred_fallthru
              _
            // Predicated region
            $region89: #{mil_attention_fc_surv_forward.1} parent=83 // pred_check
              _
            $region90: #{mil_attention_fc_surv_forward.1} parent=83 // pred_check_branch
              %2500 = sbr.rel target = $region92
            $region91: #{mil_attention_fc_surv_forward.1} parent=83 // pred_region
              %s2502 = ssub.s32 256, 1
              %s2503 = sshrl.u32 %s2489, 4
              // While loop
              $region93: #{mil_attention_fc_surv_forward.1} parent=91 // loop_pre_header
                _
              $region94: #{mil_attention_fc_surv_forward.1} parent=91 // loop_header
                %s2505 = sphi 0, %s2507
                %p2506 = scmp.ge.s32.totalorder %s2505, %s2503
                %s2510 = sphi 0, %s2547
                %s2511 = sphi %s2446, %s2550
                %s2512 = sphi %s2493, %s2551
              $region95: #{mil_attention_fc_surv_forward.1} parent=91 // loop_header_branch
                %2509 = sbr.rel (%p2506) target = $region99
              $region96: #{mil_attention_fc_surv_forward.1} parent=91 // loop_body
                %v2513 = vld [vmem:[%s2511] sm:%s2502]
                %2514 = vst [vmem:[%s2512] sm:%s2502] %v2513
                %v2515 = vld [vmem:[%s2511 + $0x8] sm:%s2502]
                %2516 = vst [vmem:[%s2512 + $0x8] sm:%s2502] %v2515
                %v2517 = vld [vmem:[%s2511 + $0x10] sm:%s2502]
                %2518 = vst [vmem:[%s2512 + $0x10] sm:%s2502] %v2517
                %v2519 = vld [vmem:[%s2511 + $0x18] sm:%s2502]
                %2520 = vst [vmem:[%s2512 + $0x18] sm:%s2502] %v2519
                %v2521 = vld [vmem:[%s2511 + $0x20] sm:%s2502]
                %2522 = vst [vmem:[%s2512 + $0x20] sm:%s2502] %v2521
                %v2523 = vld [vmem:[%s2511 + $0x28] sm:%s2502]
                %2524 = vst [vmem:[%s2512 + $0x28] sm:%s2502] %v2523
                %v2525 = vld [vmem:[%s2511 + $0x30] sm:%s2502]
                %2526 = vst [vmem:[%s2512 + $0x30] sm:%s2502] %v2525
                %v2527 = vld [vmem:[%s2511 + $0x38] sm:%s2502]
                %2528 = vst [vmem:[%s2512 + $0x38] sm:%s2502] %v2527
                %v2529 = vld [vmem:[%s2511 + $0x40] sm:%s2502]
                %2530 = vst [vmem:[%s2512 + $0x40] sm:%s2502] %v2529
                %v2531 = vld [vmem:[%s2511 + $0x48] sm:%s2502]
                %2532 = vst [vmem:[%s2512 + $0x48] sm:%s2502] %v2531
                %v2533 = vld [vmem:[%s2511 + $0x50] sm:%s2502]
                %2534 = vst [vmem:[%s2512 + $0x50] sm:%s2502] %v2533
                %v2535 = vld [vmem:[%s2511 + $0x58] sm:%s2502]
                %2536 = vst [vmem:[%s2512 + $0x58] sm:%s2502] %v2535
                %v2537 = vld [vmem:[%s2511 + $0x60] sm:%s2502]
                %2538 = vst [vmem:[%s2512 + $0x60] sm:%s2502] %v2537
                %v2539 = vld [vmem:[%s2511 + $0x68] sm:%s2502]
                %2540 = vst [vmem:[%s2512 + $0x68] sm:%s2502] %v2539
                %v2541 = vld [vmem:[%s2511 + $0x70] sm:%s2502]
                %2542 = vst [vmem:[%s2512 + $0x70] sm:%s2502] %v2541
                %v2543 = vld [vmem:[%s2511 + $0x78] sm:%s2502]
                %2544 = vst [vmem:[%s2512 + $0x78] sm:%s2502] %v2543
                %s2545 = sadd.s32 1, %s2510
                %p2546 = scmp.ge.s32.totalorder %s2545, %s2503
                %s2547 = scalar_select %p2546, 0, %s2545
                %s2548 = smul.u32 %s2547, 128
                %s2549 = smul.u32 %s2547, 128
                %s2550 = scalar_lea.vmem %s2446, %s2548 [#allocation11]
                %s2551 = scalar_lea.vmem %s2493, %s2549
              $region97: #{mil_attention_fc_surv_forward.1} parent=91 // loop_footer
                %s2507 = sadd.s32 %s2505, 1
              $region98: #{mil_attention_fc_surv_forward.1} parent=91 // loop_footer_branch
                %2504 = sbr.rel target = $region94
              $region99: #{mil_attention_fc_surv_forward.1} parent=91 // loop_exit
                _
              %s2552 = sshrl.u32 %s2489, 4
              %s2553 = sand.u32 %s2489, 15
              %s2554 = smul.u32 %s2552, 16
              %s2555 = smul.u32 8, %s2554
              %s2556 = scalar_lea.vmem %s2446, %s2555 [#allocation11]
              %s2557 = smul.u32 8, %s2554
              %s2558 = scalar_lea.vmem %s2493, %s2557
              // While loop
              $region100: #{mil_attention_fc_surv_forward.1} parent=91 // loop_pre_header
                _
              $region101: #{mil_attention_fc_surv_forward.1} parent=91 // loop_header
                %s2560 = sphi 0, %s2562
                %p2561 = scmp.ge.s32.totalorder %s2560, %s2553
                %s2565 = sphi 0, %s2572
                %s2566 = sphi %s2556, %s2575
                %s2567 = sphi %s2558, %s2576
              $region102: #{mil_attention_fc_surv_forward.1} parent=91 // loop_header_branch
                %2564 = sbr.rel (%p2561) target = $region106
              $region103: #{mil_attention_fc_surv_forward.1} parent=91 // loop_body
                %v2568 = vld [vmem:[%s2566] sm:%s2502]
                %2569 = vst [vmem:[%s2567] sm:%s2502] %v2568
                %s2570 = sadd.s32 1, %s2565
                %p2571 = scmp.ge.s32.totalorder %s2570, %s2553
                %s2572 = scalar_select %p2571, 0, %s2570
                %s2573 = smul.u32 %s2572, 8
                %s2574 = smul.u32 %s2572, 8
                %s2575 = scalar_lea.vmem %s2556, %s2573 [#allocation11]
                %s2576 = scalar_lea.vmem %s2558, %s2574
              $region104: #{mil_attention_fc_surv_forward.1} parent=91 // loop_footer
                %s2562 = sadd.s32 %s2560, 1
              $region105: #{mil_attention_fc_surv_forward.1} parent=91 // loop_footer_branch
                %2559 = sbr.rel target = $region101
              $region106: #{mil_attention_fc_surv_forward.1} parent=91 // loop_exit
                _
            $region92: #{mil_attention_fc_surv_forward.1} parent=83 // pred_fallthru
              _
          $region84: #{mil_attention_fc_surv_forward.1} parent=79 // pred_fallthru
            _
          %2655 = vnop
        $region80: #{mil_attention_fc_surv_forward.1} parent=55 // pred_fallthru
          _
        // Predicated region
        $region129: #{mil_attention_fc_surv_forward.1} parent=55 // pred_check
          %p2656 = pneg %p235
        $region130: #{mil_attention_fc_surv_forward.1} parent=55 // pred_check_branch
          %2658 = sbr.rel (%p2656) target = $region132
        $region131: #{mil_attention_fc_surv_forward.1} parent=55 // pred_region
          %2660 = dma.done [#allocation7], 16
        $region132: #{mil_attention_fc_surv_forward.1} parent=55 // pred_fallthru
          _
        // Predicated region
        $region133: #{mil_attention_fc_surv_forward.1} parent=55 // pred_check
          %p2661 = pneg %p256
        $region134: #{mil_attention_fc_surv_forward.1} parent=55 // pred_check_branch
          %2663 = sbr.rel (%p2661) target = $region136
        $region135: #{mil_attention_fc_surv_forward.1} parent=55 // pred_region
          %2665 = dma.done [#allocation9], 16
        $region136: #{mil_attention_fc_surv_forward.1} parent=55 // pred_fallthru
          _
        // Predicated region
        $region137: #{mil_attention_fc_surv_forward.1} parent=55 // pred_check
          %p2666 = pneg %p277
        $region138: #{mil_attention_fc_surv_forward.1} parent=55 // pred_check_branch
          %2668 = sbr.rel (%p2666) target = $region140
        $region139: #{mil_attention_fc_surv_forward.1} parent=55 // pred_region
          %2670 = dma.done [#allocation9], 16
        $region140: #{mil_attention_fc_surv_forward.1} parent=55 // pred_fallthru
          _
      $region56: #{mil_attention_fc_surv_forward.1} parent=5 // pred_fallthru
        _
      %p2671 = scmp.le.s32.totalorder 2, %s23
      // Predicated region
      $region141: #{mil_attention_fc_surv_forward.1} parent=5 // pred_check
        %p2672 = pneg %p2671
      $region142: #{mil_attention_fc_surv_forward.1} parent=5 // pred_check_branch
        %2674 = sbr.rel (%p2672) target = $region144
      $region143: #{mil_attention_fc_surv_forward.1} parent=5 // pred_region
        %s2675 = ssub.s32 %s23, 2
        // Predicated region
        $region145: #{mil_attention_fc_surv_forward.1} parent=143 // pred_check
          %p2676 = pneg %p309
        $region146: #{mil_attention_fc_surv_forward.1} parent=143 // pred_check_branch
          %2678 = sbr.rel (%p2676) target = $region148
        $region147: #{mil_attention_fc_surv_forward.1} parent=143 // pred_region
          %s2679 = sand.u32 %s294, 1
          %s2680 = sand.u32 %s294, 1
          %s2681 = smul.addr %s2680, 128
          %s2682 = scalar_lea.vmem [#allocation11], %s2681
        $region148: #{mil_attention_fc_surv_forward.1} parent=143 // pred_fallthru
          _
      $region144: #{mil_attention_fc_surv_forward.1} parent=5 // pred_fallthru
        _
    $region6: #{mil_attention_fc_surv_forward.1} parent=1 // loop_footer
      %s27 = sadd.s32 1, %s23
    $region7: #{mil_attention_fc_surv_forward.1} parent=1 // loop_footer_branch
      %22 = sbr.rel target = $region3
    $region8: #{mil_attention_fc_surv_forward.1} parent=1 // loop_exit
      _
    %2683 = vsyncpa [#allocation7], 1
    %s2684 = scalar_lea.sflag [#allocation7], 1
    %2685 = vsyncpa %s2684, 1
    %2686 = vsyncpa [#allocation9], 1

</llo_original>
